<compile_context>
chip_gen: v7x
topology: tpu7x:2x2x1
jax: 0.10.0
libtpu: 0.0.40
codegen_flags: <defaults>
</compile_context>

<pallas_src>
import functools
import math

import jax
import jax.numpy as jnp
from jax import lax
from jax.experimental import pallas as pl
from jax.experimental.pallas import tpu as pltpu

# ---------------- config (small but consistent with the module) -------------
IGNORE_INDEX = -100
PAD_ID = 1025
VOCAB_SIZE = PAD_ID + 1          # 1026
V_PAD = 1152                     # vocab padded to a multiple of 128 lanes
PAD_BIAS = -1e30                 # bias for pad columns (exp underflows to 0)
NEG = -1e30                      # causal-mask fill

D_EMBED = 8
Q = 4
D_MODEL = 32
SEQ_LEN = 8
N_LAYER = 2
N_HEAD = 2
HEAD_DIM = D_MODEL // N_HEAD
D_FF = 4 * D_MODEL
LN_EPS = 1e-5
LABEL_SMOOTH = 0.1

W_DTYPE = jnp.bfloat16           # MXU operand dtype for all weight matrices
MAX_TILE_B = 32                  # 32 sequences * SEQ_LEN = 256 tokens per tile


def _layer_norm(u, g, b):
    mu = jnp.mean(u, axis=-1, keepdims=True)
    var = jnp.mean((u - mu) ** 2, axis=-1, keepdims=True)
    return (u - mu) * lax.rsqrt(var + LN_EPS) * g + b


# ---------------- the fused forward kernel -----------------------------------
def _fused_kernel(compute_loss, *refs):
    if compute_loss:
        (x_ref, wproj_ref, wpe_ref, glob_ref, ln_ref, wattn_ref, wap_ref,
         bias_ref, wfc_ref, wmp_ref, whead_ref, bhead_ref, labels_ref,
         out_ref, tot_ref, cnt_ref) = refs
    else:
        (x_ref, wproj_ref, wpe_ref, glob_ref, ln_ref, wattn_ref, wap_ref,
         bias_ref, wfc_ref, wmp_ref, out_ref) = refs

    T = wpe_ref.shape[0]
    BT = x_ref.shape[0]
    Bt = BT // T                                     # sequences in this tile

    b_proj = glob_ref[0:1, :]
    lnf_g = glob_ref[1:2, :]
    lnf_b = glob_ref[2:3, :]

    # ---- projection of concatenated codebook embeddings + position emb ----
    h = jnp.dot(x_ref[...].astype(W_DTYPE), wproj_ref[...],
                preferred_element_type=jnp.float32) + b_proj        # (BT, D)
    h = (h.reshape(Bt, T, D_MODEL) + wpe_ref[...][None, :, :]).reshape(BT, D_MODEL)

    # causal mask (per sequence), built once
    row = lax.broadcasted_iota(jnp.int32, (T, T), 0)
    col = lax.broadcasted_iota(jnp.int32, (T, T), 1)
    causal = (col <= row)[None]                                     # (1, T, T)
    scale = 1.0 / math.sqrt(HEAD_DIM)
    gelu_c = math.sqrt(2.0 / math.pi)

    # ---- N_LAYER GPT2 blocks, statically unrolled, h stays on-chip ----
    for li in range(N_LAYER):
        ln1_g = ln_ref[li, 0:1, :]
        ln1_b = ln_ref[li, 1:2, :]
        ln2_g = ln_ref[li, 2:3, :]
        ln2_b = ln_ref[li, 3:4, :]
        b_attn = bias_ref[li, 0:1, 0:3 * D_MODEL]
        b_ap = bias_ref[li, 1:2, 0:D_MODEL]
        b_fc = bias_ref[li, 2:3, :]
        b_mp = bias_ref[li, 3:4, 0:D_MODEL]

        # --- causal multi-head self attention (pre-LN) ---
        x1 = _layer_norm(h, ln1_g, ln1_b)
        qkv = jnp.dot(x1.astype(W_DTYPE), wattn_ref[li],
                      preferred_element_type=jnp.float32) + b_attn  # (BT, 3D)

        # fold all heads into one leading batch dim: (N_HEAD*Bt, T, HEAD_DIM)
        def _heads(base):
            return jnp.concatenate(
                [qkv[:, base + hi * HEAD_DIM: base + (hi + 1) * HEAD_DIM]
                 .reshape(Bt, T, HEAD_DIM) for hi in range(N_HEAD)], axis=0)

        qh = _heads(0)
        kh = _heads(D_MODEL)
        vh = _heads(2 * D_MODEL)

        s = jnp.einsum('bqd,bkd->bqk', qh.astype(W_DTYPE), kh.astype(W_DTYPE),
                       preferred_element_type=jnp.float32) * scale
        s = jnp.where(causal, s, NEG)
        s = s - jnp.max(s, axis=-1, keepdims=True)
        p = jnp.exp(s)
        p = p * pl.reciprocal(jnp.sum(p, axis=-1, keepdims=True), approx=True)
        o = jnp.einsum('bqk,bkd->bqd', p.astype(W_DTYPE), vh.astype(W_DTYPE),
                       preferred_element_type=jnp.float32)          # (H*Bt, T, hd)

        # merge heads back to (BT, D) and do ONE output projection
        o_cat = jnp.concatenate(
            [o[hi * Bt:(hi + 1) * Bt].reshape(BT, HEAD_DIM)
             for hi in range(N_HEAD)], axis=-1)                     # (BT, D)
        attn = jnp.dot(o_cat.astype(W_DTYPE), wap_ref[li],
                       preferred_element_type=jnp.float32) + b_ap
        h = h + attn                                                # residual 1

        # --- MLP (gelu_new) ---
        x2 = _layer_norm(h, ln2_g, ln2_b)
        h1 = jnp.dot(x2.astype(W_DTYPE), wfc_ref[li],
                     preferred_element_type=jnp.float32) + b_fc
        h1 = 0.5 * h1 * (1.0 + jnp.tanh(gelu_c * (h1 + 0.044715 * (h1 * h1 * h1))))
        h = h + jnp.dot(h1.astype(W_DTYPE), wmp_ref[li],
                        preferred_element_type=jnp.float32) + b_mp  # residual 2

    # ---- final layer norm ----
    h2 = _layer_norm(h, lnf_g, lnf_b)                               # (BT, D)

    if not compute_loss:
        out_ref[...] = h2
        return

    # ---- per-codebook heads + label-smoothed CE, accumulated over tiles ----
    @pl.when(pl.program_id(0) == 0)
    def _():
        tot_ref[...] = jnp.zeros_like(tot_ref)
        cnt_ref[...] = jnp.zeros_like(cnt_ref)

    h2b = h2.astype(W_DTYPE)
    labels = labels_ref[...]                                        # (BT, Q)
    # hoisted out of the codebook loop (JAX does not CSE broadcast_in_dim)
    cols = lax.broadcasted_iota(jnp.int32, (BT, V_PAD), 1)
    real = (lax.broadcasted_iota(jnp.int32, (1, V_PAD), 1)
            < VOCAB_SIZE).astype(jnp.float32)                       # (1, V_PAD)

    tot_parts = []
    cnt_parts = []
    for qi in range(Q):
        # per-codebook logits: never materialize the full (BT, Q*V_PAD) slab
        lg = jnp.dot(h2b, whead_ref[qi],
                     preferred_element_type=jnp.float32) + bhead_ref[qi]
        lbl = labels[:, qi:qi + 1]                                   # (BT, 1)

        m = jnp.max(lg, axis=-1, keepdims=True)
        lse = jnp.log(jnp.sum(jnp.exp(lg - m), axis=-1, keepdims=True)) + m
        picked = jnp.sum(jnp.where(cols == lbl, lg, 0.0),
                         axis=-1, keepdims=True)                     # lg[label]
        real_sum = jnp.sum(lg * real, axis=-1, keepdims=True)        # sum real cols

        nll = lse - picked
        smooth = lse - real_sum * (1.0 / VOCAB_SIZE)
        valid = (lbl != IGNORE_INDEX).astype(jnp.float32)
        per_tok = ((1.0 - LABEL_SMOOTH) * nll + LABEL_SMOOTH * smooth) * valid

        tot_parts.append(jnp.sum(per_tok, axis=0, keepdims=True))    # (1,1)
        cnt_parts.append(jnp.sum(valid, axis=0, keepdims=True))      # (1,1)

    tot_ref[...] = tot_ref[...] + jnp.concatenate(tot_parts, axis=-1)
    cnt_ref[...] = cnt_ref[...] + jnp.concatenate(cnt_parts, axis=-1)

    @pl.when(pl.program_id(0) == pl.num_programs(0) - 1)
    def _():
        # TODO(synk): if every label of a codebook is IGNORE_INDEX this is NaN,
        # matching PyTorch's F.cross_entropy behavior on an all-ignored batch.
        out_ref[...] = jnp.sum(tot_ref[...] / cnt_ref[...],
                               axis=-1, keepdims=True)


# ---------------- pallas_call wrapper -----------------------------------------
def _fused_call(compute_loss, args, tile_b, b_pad, out_shape):
    tile_bt = tile_b * SEQ_LEN
    grid = (b_pad // tile_b,)

    def resident(a):                       # weights: same block every step
        nd = a.ndim
        return pl.BlockSpec(a.shape, lambda i, _nd=nd: (0,) * _nd)

    def rowtiled(a):                       # activations: tiled over tokens
        nd = a.ndim
        return pl.BlockSpec((tile_bt,) + a.shape[1:],
                            lambda i, _nd=nd: (i,) + (0,) * (_nd - 1))

    in_specs = [rowtiled(args[0])] + [resident(a) for a in args[1:]]
    if compute_loss:
        in_specs[-1] = rowtiled(args[-1])  # labels tile along with x
        out_spec = pl.BlockSpec((1, 1), lambda i: (0, 0))
        scratch = [pltpu.VMEM((1, Q), jnp.float32),   # per-codebook loss totals
                   pltpu.VMEM((1, Q), jnp.float32)]   # per-codebook valid counts
        dims = ("arbitrary",)              # sequential: scratch accumulation
    else:
        out_spec = pl.BlockSpec((tile_bt, D_MODEL), lambda i: (i, 0))
        scratch = []
        dims = ("parallel",)               # token tiles shard across v7x cores

    return pl.pallas_call(
        functools.partial(_fused_kernel, compute_loss),
        out_shape=out_shape,
        grid=grid,
        in_specs=in_specs,
        out_specs=out_spec,
        scratch_shapes=scratch,
        compiler_params=pltpu.CompilerParams(dimension_semantics=dims),
    )(*args)


# ---------------- parameters --------------------------------------------------
def init_params(key):
    def nrm(k, shape, std=0.02):
        return std * jax.random.normal(k, shape, dtype=jnp.float32)

    keys = jax.random.split(key, 64)
    ki = iter(keys)
    p = {}
    p['emb'] = jnp.stack([nrm(next(ki), (VOCAB_SIZE, D_EMBED)) for _ in range(Q)])
    p['w_proj'] = nrm(next(ki), (Q * D_EMBED, D_MODEL)).astype(W_DTYPE)
    p['wpe'] = nrm(next(ki), (SEQ_LEN, D_MODEL))

    # packed global small params: [b_proj; lnf_g; lnf_b]
    p['glob_pack'] = jnp.stack([jnp.zeros((D_MODEL,), jnp.float32),
                                jnp.ones((D_MODEL,), jnp.float32),
                                jnp.zeros((D_MODEL,), jnp.float32)], axis=0)

    # packed per-layer LN params: [ln1_g; ln1_b; ln2_g; ln2_b]  (N_LAYER, 4, D)
    ln_g = jnp.ones((N_LAYER, D_MODEL), jnp.float32)
    ln_b = jnp.zeros((N_LAYER, D_MODEL), jnp.float32)
    p['ln_pack'] = jnp.stack([ln_g, ln_b, ln_g, ln_b], axis=1)

    # stacked per-layer weights, bf16 for the MXU
    p['w_attn'] = jnp.stack([nrm(next(ki), (D_MODEL, 3 * D_MODEL))
                             for _ in range(N_LAYER)]).astype(W_DTYPE)
    p['w_attnproj'] = jnp.stack([nrm(next(ki), (D_MODEL, D_MODEL))
                                 for _ in range(N_LAYER)]).astype(W_DTYPE)
    p['w_fc'] = jnp.stack([nrm(next(ki), (D_MODEL, D_FF))
                           for _ in range(N_LAYER)]).astype(W_DTYPE)
    p['w_mlpproj'] = jnp.stack([nrm(next(ki), (D_FF, D_MODEL))
                                for _ in range(N_LAYER)]).astype(W_DTYPE)

    # packed per-layer biases (rows padded to D_FF lanes): (N_LAYER, 4, D_FF)
    def padr(x):
        return jnp.pad(x, ((0, 0), (0, D_FF - x.shape[-1])))

    b_attn = jnp.zeros((N_LAYER, 3 * D_MODEL), jnp.float32)
    b_ap = jnp.zeros((N_LAYER, D_MODEL), jnp.float32)
    b_fc = jnp.zeros((N_LAYER, D_FF), jnp.float32)
    b_mp = jnp.zeros((N_LAYER, D_MODEL), jnp.float32)
    p['bias_pack'] = jnp.stack([padr(b_attn), padr(b_ap), b_fc, padr(b_mp)], axis=1)

    # per-head params (returned in the labels=None path, mirroring self.heads)
    heads = [dict(w=nrm(next(ki), (D_MODEL, VOCAB_SIZE)),
                  b=jnp.zeros((1, VOCAB_SIZE), jnp.float32)) for _ in range(Q)]
    p['heads'] = heads

    # stacked / padded head params for the fused CE kernel
    pad = V_PAD - VOCAB_SIZE
    p['w_heads'] = jnp.stack([jnp.pad(hd['w'], ((0, 0), (0, pad)))
                              for hd in heads]).astype(W_DTYPE)       # (Q,D,V_PAD)
    p['b_heads'] = jnp.stack([jnp.pad(hd['b'], ((0, 0), (0, pad)),
                                      constant_values=PAD_BIAS)
                              for hd in heads])                       # (Q,1,V_PAD) f32
    return p, keys[-1]


# ---------------- forward -----------------------------------------------------
def _embed(params, input_ids):
    # Embedding lookups are gathers; done in plain JAX glue, one table per codebook.
    Qn = input_ids.shape[-1]
    embeds = [params['emb'][q][input_ids[:, :, q]] for q in range(Qn)]
    return jnp.concatenate(embeds, axis=-1).astype(jnp.float32)      # (B, T, Q*De)


def _pad_batch(a, b_pad, fill):
    b = a.shape[0]
    if b == b_pad:
        return a
    widths = [(0, b_pad - b)] + [(0, 0)] * (a.ndim - 1)
    return jnp.pad(a, widths, constant_values=fill)


def _common_args(params, x_flat):
    return [x_flat, params['w_proj'], params['wpe'], params['glob_pack'],
            params['ln_pack'], params['w_attn'], params['w_attnproj'],
            params['bias_pack'], params['w_fc'], params['w_mlpproj']]


def _pick_tile(B, tile_b):
    tb = tile_b if tile_b is not None else min(MAX_TILE_B, B)
    b_pad = -(-B // tb) * tb
    return tb, b_pad


def _hidden_impl(params, input_ids, tile_b=None):
    B, T, Qn = input_ids.shape
    tb, b_pad = _pick_tile(B, tile_b)
    x = _pad_batch(_embed(params, input_ids), b_pad, 0.0)
    x = x.reshape(b_pad * T, Qn * D_EMBED)
    hidden = _fused_call(False, _common_args(params, x), tb, b_pad,
                         jax.ShapeDtypeStruct((b_pad * T, D_MODEL), jnp.float32))
    return hidden.reshape(b_pad, T, D_MODEL)[:B]


def _loss_impl(params, input_ids, labels, tile_b=None):
    B, T, Qn = input_ids.shape
    tb, b_pad = _pick_tile(B, tile_b)
    x = _pad_batch(_embed(params, input_ids), b_pad, 0.0)
    x = x.reshape(b_pad * T, Qn * D_EMBED)
    lbl = _pad_batch(labels.astype(jnp.int32), b_pad, IGNORE_INDEX)
    lbl = lbl.reshape(b_pad * T, Qn)
    args = _common_args(params, x) + [params['w_heads'], params['b_heads'], lbl]
    loss = _fused_call(True, args, tb, b_pad,
                       jax.ShapeDtypeStruct((1, 1), jnp.float32))
    return loss[0, 0]


_hidden_jit = jax.jit(_hidden_impl, static_argnames=('tile_b',))
_loss_jit = jax.jit(_loss_impl, static_argnames=('tile_b',))


def forward(params, input_ids, labels=None, tile_b=None):
    if labels is None:
        # mirrors `return (self.heads, hidden)`: head parameters + last_hidden_state
        return params['heads'], _hidden_jit(params, input_ids, tile_b=tile_b)
    return _loss_jit(params, input_ids, labels, tile_b=tile_b)


# ---------------- main --------------------------------------------------------
if __name__ == "__main__":
    key = jax.random.PRNGKey(0)
    params, key = init_params(key)

    B = 2
    k1, k2, k3 = jax.random.split(key, 3)
    input_ids = jax.random.randint(k1, (B, SEQ_LEN, Q), 0, VOCAB_SIZE)
    labels = jax.random.randint(k2, (B, SEQ_LEN, Q), 0, VOCAB_SIZE)
    ignore_mask = jax.random.uniform(k3, (B, SEQ_LEN, Q)) < 0.1
    labels = jnp.where(ignore_mask, IGNORE_INDEX, labels)

    heads, hidden = forward(params, input_ids, labels=None)
    loss = forward(params, input_ids, labels=labels)
    # exercise the multi-tile (grid > 1) path: loss must be tile-invariant
    loss_tiled = forward(params, input_ids, labels=labels, tile_b=1)

    jax.block_until_ready((hidden, loss, loss_tiled))
    assert hidden.shape == (B, SEQ_LEN, D_MODEL)
    assert bool(jnp.isfinite(loss))
    assert abs(float(loss) - float(loss_tiled)) < 1e-4 * max(1.0, abs(float(loss)))
    print("KERNEL_OK")
</pallas_src>

<mosaic_0001>
module attributes {stable_mosaic.version = 11 : i64} {
  func.func @_fused_kernel(%arg0: i32, %arg1: memref<16x32xf32, #tpu.memory_space<vmem>>, %arg2: memref<32x32xbf16, #tpu.memory_space<vmem>>, %arg3: memref<8x32xf32, #tpu.memory_space<vmem>>, %arg4: memref<3x32xf32, #tpu.memory_space<vmem>>, %arg5: memref<2x4x32xf32, #tpu.memory_space<vmem>>, %arg6: memref<2x32x96xbf16, #tpu.memory_space<vmem>>, %arg7: memref<2x32x32xbf16, #tpu.memory_space<vmem>>, %arg8: memref<2x4x128xf32, #tpu.memory_space<vmem>>, %arg9: memref<2x32x128xbf16, #tpu.memory_space<vmem>>, %arg10: memref<2x128x32xbf16, #tpu.memory_space<vmem>>, %arg11: memref<16x32xf32, #tpu.memory_space<vmem>>) attributes {dimension_semantics = [#tpu.dimension_semantics<parallel>], iteration_bounds = array<i64: 1>, scalar_prefetch = 0 : i64, scratch_operands = 0 : i64, tpu.core_type = #tpu.core_type<tc>, window_params = [{transform_indices = @transform_0, window_bounds = array<i64: 16, 32>}, {pipeline_mode = #tpu.pipeline_mode<synchronous>, transform_indices = @transform_1, window_bounds = array<i64: 32, 32>}, {pipeline_mode = #tpu.pipeline_mode<synchronous>, transform_indices = @transform_2, window_bounds = array<i64: 8, 32>}, {pipeline_mode = #tpu.pipeline_mode<synchronous>, transform_indices = @transform_3, window_bounds = array<i64: 3, 32>}, {pipeline_mode = #tpu.pipeline_mode<synchronous>, transform_indices = @transform_4, window_bounds = array<i64: 2, 4, 32>}, {pipeline_mode = #tpu.pipeline_mode<synchronous>, transform_indices = @transform_5, window_bounds = array<i64: 2, 32, 96>}, {pipeline_mode = #tpu.pipeline_mode<synchronous>, transform_indices = @transform_6, window_bounds = array<i64: 2, 32, 32>}, {pipeline_mode = #tpu.pipeline_mode<synchronous>, transform_indices = @transform_7, window_bounds = array<i64: 2, 4, 128>}, {pipeline_mode = #tpu.pipeline_mode<synchronous>, transform_indices = @transform_8, window_bounds = array<i64: 2, 32, 128>}, {pipeline_mode = #tpu.pipeline_mode<synchronous>, transform_indices = @transform_9, window_bounds = array<i64: 2, 128, 32>}, {transform_indices = @transform_10, window_bounds = array<i64: 16, 32>}]} {
    %c0 = arith.constant 0 : index
    %c0_0 = arith.constant 0 : index
    %0 = vector.load %arg4[%c0, %c0_0] : memref<3x32xf32, #tpu.memory_space<vmem>>, vector<1x32xf32>
    %c1 = arith.constant 1 : index
    %c0_1 = arith.constant 0 : index
    %1 = vector.load %arg4[%c1, %c0_1] : memref<3x32xf32, #tpu.memory_space<vmem>>, vector<1x32xf32>
    %c2 = arith.constant 2 : index
    %c0_2 = arith.constant 0 : index
    %2 = vector.load %arg4[%c2, %c0_2] : memref<3x32xf32, #tpu.memory_space<vmem>>, vector<1x32xf32>
    %c0_3 = arith.constant 0 : index
    %c0_4 = arith.constant 0 : index
    %3 = vector.load %arg1[%c0_3, %c0_4] : memref<16x32xf32, #tpu.memory_space<vmem>>, vector<16x32xf32>
    %4 = arith.truncf %3 : vector<16x32xf32> to vector<16x32xbf16>
    %c0_5 = arith.constant 0 : index
    %c0_6 = arith.constant 0 : index
    %5 = vector.load %arg2[%c0_5, %c0_6] : memref<32x32xbf16, #tpu.memory_space<vmem>>, vector<32x32xbf16>
    %cst = arith.constant dense<0.000000e+00> : vector<16x32xf32>
    %6 = tpu.matmul %4, %5, %cst {dimension_numbers = #tpu.dot_dimension_numbers<[1], [0], [0], [1], [0, 0, 1, 1], [], []>} : vector<16x32xbf16>, vector<32x32xbf16>, vector<16x32xf32> -> vector<16x32xf32>
    %7 = vector.broadcast %0 : vector<1x32xf32> to vector<16x32xf32>
    %8 = arith.addf %6, %7 : vector<16x32xf32>
    %9 = vector.shape_cast %8 : vector<16x32xf32> to vector<2x8x32xf32>
    %c0_7 = arith.constant 0 : index
    %c0_8 = arith.constant 0 : index
    %10 = vector.load %arg3[%c0_7, %c0_8] : memref<8x32xf32, #tpu.memory_space<vmem>>, vector<8x32xf32>
    %11 = vector.shape_cast %10 : vector<8x32xf32> to vector<1x8x32xf32>
    %12 = vector.broadcast %11 : vector<1x8x32xf32> to vector<2x8x32xf32>
    %13 = arith.addf %9, %12 : vector<2x8x32xf32>
    %14 = vector.shape_cast %13 : vector<2x8x32xf32> to vector<16x32xf32>
    %15 = tpu.iota {dimensions = array<i32: 0>} : vector<8x8xi32>
    %16 = tpu.iota {dimensions = array<i32: 1>} : vector<8x8xi32>
    %17 = arith.cmpi sle, %16, %15 : vector<8x8xi32>
    %18 = vector.shape_cast %17 : vector<8x8xi1> to vector<1x8x8xi1>
    %c0_9 = arith.constant 0 : index
    %c0_10 = arith.constant 0 : index
    %c0_11 = arith.constant 0 : index
    %19 = vector.load %arg5[%c0_9, %c0_10, %c0_11] : memref<2x4x32xf32, #tpu.memory_space<vmem>>, vector<1x1x32xf32>
    %20 = vector.shape_cast %19 : vector<1x1x32xf32> to vector<1x32xf32>
    %c0_12 = arith.constant 0 : index
    %c1_13 = arith.constant 1 : index
    %c0_14 = arith.constant 0 : index
    %21 = vector.load %arg5[%c0_12, %c1_13, %c0_14] : memref<2x4x32xf32, #tpu.memory_space<vmem>>, vector<1x1x32xf32>
    %22 = vector.shape_cast %21 : vector<1x1x32xf32> to vector<1x32xf32>
    %c0_15 = arith.constant 0 : index
    %c2_16 = arith.constant 2 : index
    %c0_17 = arith.constant 0 : index
    %23 = vector.load %arg5[%c0_15, %c2_16, %c0_17] : memref<2x4x32xf32, #tpu.memory_space<vmem>>, vector<1x1x32xf32>
    %24 = vector.shape_cast %23 : vector<1x1x32xf32> to vector<1x32xf32>
    %c0_18 = arith.constant 0 : index
    %c3 = arith.constant 3 : index
    %c0_19 = arith.constant 0 : index
    %25 = vector.load %arg5[%c0_18, %c3, %c0_19] : memref<2x4x32xf32, #tpu.memory_space<vmem>>, vector<1x1x32xf32>
    %26 = vector.shape_cast %25 : vector<1x1x32xf32> to vector<1x32xf32>
    %c0_20 = arith.constant 0 : index
    %c0_21 = arith.constant 0 : index
    %c0_22 = arith.constant 0 : index
    %27 = vector.load %arg8[%c0_20, %c0_21, %c0_22] : memref<2x4x128xf32, #tpu.memory_space<vmem>>, vector<1x1x96xf32>
    %28 = vector.shape_cast %27 : vector<1x1x96xf32> to vector<1x96xf32>
    %c0_23 = arith.constant 0 : index
    %c1_24 = arith.constant 1 : index
    %c0_25 = arith.constant 0 : index
    %29 = vector.load %arg8[%c0_23, %c1_24, %c0_25] : memref<2x4x128xf32, #tpu.memory_space<vmem>>, vector<1x1x32xf32>
    %30 = vector.shape_cast %29 : vector<1x1x32xf32> to vector<1x32xf32>
    %c0_26 = arith.constant 0 : index
    %c2_27 = arith.constant 2 : index
    %c0_28 = arith.constant 0 : index
    %31 = vector.load %arg8[%c0_26, %c2_27, %c0_28] : memref<2x4x128xf32, #tpu.memory_space<vmem>>, vector<1x1x128xf32>
    %32 = vector.shape_cast %31 : vector<1x1x128xf32> to vector<1x128xf32>
    %c0_29 = arith.constant 0 : index
    %c3_30 = arith.constant 3 : index
    %c0_31 = arith.constant 0 : index
    %33 = vector.load %arg8[%c0_29, %c3_30, %c0_31] : memref<2x4x128xf32, #tpu.memory_space<vmem>>, vector<1x1x32xf32>
    %34 = vector.shape_cast %33 : vector<1x1x32xf32> to vector<1x32xf32>
    %cst_32 = arith.constant dense<0.000000e+00> : vector<16xf32>
    %35 = vector.multi_reduction <add>, %14, %cst_32 [1] : vector<16x32xf32> to vector<16xf32>
    %36 = vector.shape_cast %35 : vector<16xf32> to vector<16x1xf32>
    %cst_33 = arith.constant 3.200000e+01 : f32
    %37 = vector.broadcast %cst_33 : f32 to vector<16x1xf32>
    %38 = arith.divf %36, %37 : vector<16x1xf32>
    %39 = vector.broadcast %38 : vector<16x1xf32> to vector<16x32xf32>
    %40 = arith.subf %14, %39 : vector<16x32xf32>
    %41 = arith.mulf %40, %40 : vector<16x32xf32>
    %cst_34 = arith.constant dense<0.000000e+00> : vector<16xf32>
    %42 = vector.multi_reduction <add>, %41, %cst_34 [1] : vector<16x32xf32> to vector<16xf32>
    %43 = vector.shape_cast %42 : vector<16xf32> to vector<16x1xf32>
    %cst_35 = arith.constant 3.200000e+01 : f32
    %44 = vector.broadcast %cst_35 : f32 to vector<16x1xf32>
    %45 = arith.divf %43, %44 : vector<16x1xf32>
    %46 = vector.broadcast %38 : vector<16x1xf32> to vector<16x32xf32>
    %47 = arith.subf %14, %46 : vector<16x32xf32>
    %cst_36 = arith.constant 9.99999974E-6 : f32
    %48 = vector.broadcast %cst_36 : f32 to vector<16x1xf32>
    %49 = arith.addf %45, %48 : vector<16x1xf32>
    %50 = math.rsqrt %49 : vector<16x1xf32>
    %51 = vector.broadcast %50 : vector<16x1xf32> to vector<16x32xf32>
    %52 = arith.mulf %47, %51 : vector<16x32xf32>
    %53 = vector.broadcast %20 : vector<1x32xf32> to vector<16x32xf32>
    %54 = arith.mulf %52, %53 : vector<16x32xf32>
    %55 = vector.broadcast %22 : vector<1x32xf32> to vector<16x32xf32>
    %56 = arith.addf %54, %55 : vector<16x32xf32>
    %57 = arith.truncf %56 : vector<16x32xf32> to vector<16x32xbf16>
    %c0_37 = arith.constant 0 : index
    %c0_38 = arith.constant 0 : index
    %c0_39 = arith.constant 0 : index
    %58 = vector.load %arg6[%c0_37, %c0_38, %c0_39] : memref<2x32x96xbf16, #tpu.memory_space<vmem>>, vector<1x32x96xbf16>
    %59 = vector.shape_cast %58 : vector<1x32x96xbf16> to vector<32x96xbf16>
    %cst_40 = arith.constant dense<0.000000e+00> : vector<16x96xf32>
    %60 = tpu.matmul %57, %59, %cst_40 {dimension_numbers = #tpu.dot_dimension_numbers<[1], [0], [0], [1], [0, 0, 1, 1], [], []>} : vector<16x32xbf16>, vector<32x96xbf16>, vector<16x96xf32> -> vector<16x96xf32>
    %61 = vector.broadcast %28 : vector<1x96xf32> to vector<16x96xf32>
    %62 = arith.addf %60, %61 : vector<16x96xf32>
    %63 = vector.extract_strided_slice %62 {offsets = [0, 0], sizes = [16, 16], strides = [1, 1]} : vector<16x96xf32> to vector<16x16xf32>
    %64 = vector.shape_cast %63 : vector<16x16xf32> to vector<2x8x16xf32>
    %65 = vector.extract_strided_slice %62 {offsets = [0, 16], sizes = [16, 16], strides = [1, 1]} : vector<16x96xf32> to vector<16x16xf32>
    %66 = vector.shape_cast %65 : vector<16x16xf32> to vector<2x8x16xf32>
    %67 = tpu.concatenate %64, %66 in 0 : vector<2x8x16xf32>, vector<2x8x16xf32> -> vector<4x8x16xf32>
    %68 = vector.extract_strided_slice %62 {offsets = [0, 32], sizes = [16, 16], strides = [1, 1]} : vector<16x96xf32> to vector<16x16xf32>
    %69 = vector.shape_cast %68 : vector<16x16xf32> to vector<2x8x16xf32>
    %70 = vector.extract_strided_slice %62 {offsets = [0, 48], sizes = [16, 16], strides = [1, 1]} : vector<16x96xf32> to vector<16x16xf32>
    %71 = vector.shape_cast %70 : vector<16x16xf32> to vector<2x8x16xf32>
    %72 = tpu.concatenate %69, %71 in 0 : vector<2x8x16xf32>, vector<2x8x16xf32> -> vector<4x8x16xf32>
    %73 = vector.extract_strided_slice %62 {offsets = [0, 64], sizes = [16, 16], strides = [1, 1]} : vector<16x96xf32> to vector<16x16xf32>
    %74 = vector.shape_cast %73 : vector<16x16xf32> to vector<2x8x16xf32>
    %75 = vector.extract_strided_slice %62 {offsets = [0, 80], sizes = [16, 16], strides = [1, 1]} : vector<16x96xf32> to vector<16x16xf32>
    %76 = vector.shape_cast %75 : vector<16x16xf32> to vector<2x8x16xf32>
    %77 = tpu.concatenate %74, %76 in 0 : vector<2x8x16xf32>, vector<2x8x16xf32> -> vector<4x8x16xf32>
    %78 = arith.truncf %67 : vector<4x8x16xf32> to vector<4x8x16xbf16>
    %79 = arith.truncf %72 : vector<4x8x16xf32> to vector<4x8x16xbf16>
    "tpu.trace_start"() <{level = 10 : i32, message = "bqd,bkd->bqk"}> : () -> ()
    %cst_41 = arith.constant dense<0.000000e+00> : vector<4x8x8xf32>
    %80 = tpu.matmul %78, %79, %cst_41 {dimension_numbers = #tpu.dot_dimension_numbers<[2], [2], [1], [1], [0, 0, 0, 1, 1, 1], [0], [0]>} : vector<4x8x16xbf16>, vector<4x8x16xbf16>, vector<4x8x8xf32> -> vector<4x8x8xf32>
    "tpu.trace_stop"() : () -> ()
    %cst_42 = arith.constant 2.500000e-01 : f32
    %81 = vector.broadcast %cst_42 : f32 to vector<4x8x8xf32>
    %82 = arith.mulf %80, %81 : vector<4x8x8xf32>
    %cst_43 = arith.constant -1.000000e+30 : f32
    %83 = vector.shape_cast %18 : vector<1x8x8xi1> to vector<1x8x8xi1>
    %84 = vector.broadcast %83 : vector<1x8x8xi1> to vector<4x8x8xi1>
    %85 = vector.broadcast %cst_43 : f32 to vector<4x8x8xf32>
    %86 = arith.select %84, %82, %85 : vector<4x8x8xi1>, vector<4x8x8xf32>
    %cst_44 = arith.constant dense<0xFF800000> : vector<4x8xf32>
    %87 = vector.multi_reduction <maximumf>, %86, %cst_44 [2] : vector<4x8x8xf32> to vector<4x8xf32>
    %88 = vector.shape_cast %87 : vector<4x8xf32> to vector<4x8x1xf32>
    %89 = vector.broadcast %88 : vector<4x8x1xf32> to vector<4x8x8xf32>
    %90 = arith.subf %86, %89 : vector<4x8x8xf32>
    %91 = math.exp %90 : vector<4x8x8xf32>
    %cst_45 = arith.constant dense<0.000000e+00> : vector<4x8xf32>
    %92 = vector.multi_reduction <add>, %91, %cst_45 [2] : vector<4x8x8xf32> to vector<4x8xf32>
    %93 = vector.shape_cast %92 : vector<4x8xf32> to vector<4x8x1xf32>
    %94 = tpu.reciprocal %93 {approx = true} : vector<4x8x1xf32> -> vector<4x8x1xf32>
    %95 = vector.broadcast %94 : vector<4x8x1xf32> to vector<4x8x8xf32>
    %96 = arith.mulf %91, %95 : vector<4x8x8xf32>
    %97 = arith.truncf %96 : vector<4x8x8xf32> to vector<4x8x8xbf16>
    %98 = arith.truncf %77 : vector<4x8x16xf32> to vector<4x8x16xbf16>
    "tpu.trace_start"() <{level = 10 : i32, message = "bqk,bkd->bqd"}> : () -> ()
    %cst_46 = arith.constant dense<0.000000e+00> : vector<4x8x16xf32>
    %99 = tpu.matmul %97, %98, %cst_46 {dimension_numbers = #tpu.dot_dimension_numbers<[2], [1], [1], [2], [0, 0, 0, 1, 1, 2], [0], [0]>} : vector<4x8x8xbf16>, vector<4x8x16xbf16>, vector<4x8x16xf32> -> vector<4x8x16xf32>
    "tpu.trace_stop"() : () -> ()
    %100 = vector.extract_strided_slice %99 {offsets = [0, 0, 0], sizes = [2, 8, 16], strides = [1, 1, 1]} : vector<4x8x16xf32> to vector<2x8x16xf32>
    %101 = vector.shape_cast %100 : vector<2x8x16xf32> to vector<16x16xf32>
    %102 = vector.extract_strided_slice %99 {offsets = [2, 0, 0], sizes = [2, 8, 16], strides = [1, 1, 1]} : vector<4x8x16xf32> to vector<2x8x16xf32>
    %103 = vector.shape_cast %102 : vector<2x8x16xf32> to vector<16x16xf32>
    %104 = tpu.concatenate %101, %103 in 1 : vector<16x16xf32>, vector<16x16xf32> -> vector<16x32xf32>
    %105 = arith.truncf %104 : vector<16x32xf32> to vector<16x32xbf16>
    %c0_47 = arith.constant 0 : index
    %c0_48 = arith.constant 0 : index
    %c0_49 = arith.constant 0 : index
    %106 = vector.load %arg7[%c0_47, %c0_48, %c0_49] : memref<2x32x32xbf16, #tpu.memory_space<vmem>>, vector<1x32x32xbf16>
    %107 = vector.shape_cast %106 : vector<1x32x32xbf16> to vector<32x32xbf16>
    %cst_50 = arith.constant dense<0.000000e+00> : vector<16x32xf32>
    %108 = tpu.matmul %105, %107, %cst_50 {dimension_numbers = #tpu.dot_dimension_numbers<[1], [0], [0], [1], [0, 0, 1, 1], [], []>} : vector<16x32xbf16>, vector<32x32xbf16>, vector<16x32xf32> -> vector<16x32xf32>
    %109 = vector.broadcast %30 : vector<1x32xf32> to vector<16x32xf32>
    %110 = arith.addf %108, %109 : vector<16x32xf32>
    %111 = arith.addf %14, %110 : vector<16x32xf32>
    %cst_51 = arith.constant dense<0.000000e+00> : vector<16xf32>
    %112 = vector.multi_reduction <add>, %111, %cst_51 [1] : vector<16x32xf32> to vector<16xf32>
    %113 = vector.shape_cast %112 : vector<16xf32> to vector<16x1xf32>
    %cst_52 = arith.constant 3.200000e+01 : f32
    %114 = vector.broadcast %cst_52 : f32 to vector<16x1xf32>
    %115 = arith.divf %113, %114 : vector<16x1xf32>
    %116 = vector.broadcast %115 : vector<16x1xf32> to vector<16x32xf32>
    %117 = arith.subf %111, %116 : vector<16x32xf32>
    %118 = arith.mulf %117, %117 : vector<16x32xf32>
    %cst_53 = arith.constant dense<0.000000e+00> : vector<16xf32>
    %119 = vector.multi_reduction <add>, %118, %cst_53 [1] : vector<16x32xf32> to vector<16xf32>
    %120 = vector.shape_cast %119 : vector<16xf32> to vector<16x1xf32>
    %cst_54 = arith.constant 3.200000e+01 : f32
    %121 = vector.broadcast %cst_54 : f32 to vector<16x1xf32>
    %122 = arith.divf %120, %121 : vector<16x1xf32>
    %123 = vector.broadcast %115 : vector<16x1xf32> to vector<16x32xf32>
    %124 = arith.subf %111, %123 : vector<16x32xf32>
    %cst_55 = arith.constant 9.99999974E-6 : f32
    %125 = vector.broadcast %cst_55 : f32 to vector<16x1xf32>
    %126 = arith.addf %122, %125 : vector<16x1xf32>
    %127 = math.rsqrt %126 : vector<16x1xf32>
    %128 = vector.broadcast %127 : vector<16x1xf32> to vector<16x32xf32>
    %129 = arith.mulf %124, %128 : vector<16x32xf32>
    %130 = vector.broadcast %24 : vector<1x32xf32> to vector<16x32xf32>
    %131 = arith.mulf %129, %130 : vector<16x32xf32>
    %132 = vector.broadcast %26 : vector<1x32xf32> to vector<16x32xf32>
    %133 = arith.addf %131, %132 : vector<16x32xf32>
    %134 = arith.truncf %133 : vector<16x32xf32> to vector<16x32xbf16>
    %c0_56 = arith.constant 0 : index
    %c0_57 = arith.constant 0 : index
    %c0_58 = arith.constant 0 : index
    %135 = vector.load %arg9[%c0_56, %c0_57, %c0_58] : memref<2x32x128xbf16, #tpu.memory_space<vmem>>, vector<1x32x128xbf16>
    %136 = vector.shape_cast %135 : vector<1x32x128xbf16> to vector<32x128xbf16>
    %cst_59 = arith.constant dense<0.000000e+00> : vector<16x128xf32>
    %137 = tpu.matmul %134, %136, %cst_59 {dimension_numbers = #tpu.dot_dimension_numbers<[1], [0], [0], [1], [0, 0, 1, 1], [], []>} : vector<16x32xbf16>, vector<32x128xbf16>, vector<16x128xf32> -> vector<16x128xf32>
    %138 = vector.broadcast %32 : vector<1x128xf32> to vector<16x128xf32>
    %139 = arith.addf %137, %138 : vector<16x128xf32>
    %cst_60 = arith.constant 5.000000e-01 : f32
    %140 = vector.broadcast %cst_60 : f32 to vector<16x128xf32>
    %141 = arith.mulf %140, %139 : vector<16x128xf32>
    %142 = arith.mulf %139, %139 : vector<16x128xf32>
    %143 = arith.mulf %142, %139 : vector<16x128xf32>
    %cst_61 = arith.constant 4.471500e-02 : f32
    %144 = vector.broadcast %cst_61 : f32 to vector<16x128xf32>
    %145 = arith.mulf %144, %143 : vector<16x128xf32>
    %146 = arith.addf %139, %145 : vector<16x128xf32>
    %cst_62 = arith.constant 0.797884583 : f32
    %147 = vector.broadcast %cst_62 : f32 to vector<16x128xf32>
    %148 = arith.mulf %147, %146 : vector<16x128xf32>
    %149 = math.tanh %148 : vector<16x128xf32>
    %cst_63 = arith.constant 1.000000e+00 : f32
    %150 = vector.broadcast %cst_63 : f32 to vector<16x128xf32>
    %151 = arith.addf %150, %149 : vector<16x128xf32>
    %152 = arith.mulf %141, %151 : vector<16x128xf32>
    %153 = arith.truncf %152 : vector<16x128xf32> to vector<16x128xbf16>
    %c0_64 = arith.constant 0 : index
    %c0_65 = arith.constant 0 : index
    %c0_66 = arith.constant 0 : index
    %154 = vector.load %arg10[%c0_64, %c0_65, %c0_66] : memref<2x128x32xbf16, #tpu.memory_space<vmem>>, vector<1x128x32xbf16>
    %155 = vector.shape_cast %154 : vector<1x128x32xbf16> to vector<128x32xbf16>
    %cst_67 = arith.constant dense<0.000000e+00> : vector<16x32xf32>
    %156 = tpu.matmul %153, %155, %cst_67 {dimension_numbers = #tpu.dot_dimension_numbers<[1], [0], [0], [1], [0, 0, 1, 1], [], []>} : vector<16x128xbf16>, vector<128x32xbf16>, vector<16x32xf32> -> vector<16x32xf32>
    %157 = arith.addf %111, %156 : vector<16x32xf32>
    %158 = vector.broadcast %34 : vector<1x32xf32> to vector<16x32xf32>
    %159 = arith.addf %157, %158 : vector<16x32xf32>
    %c1_68 = arith.constant 1 : index
    %c0_69 = arith.constant 0 : index
    %c0_70 = arith.constant 0 : index
    %160 = vector.load %arg5[%c1_68, %c0_69, %c0_70] : memref<2x4x32xf32, #tpu.memory_space<vmem>>, vector<1x1x32xf32>
    %161 = vector.shape_cast %160 : vector<1x1x32xf32> to vector<1x32xf32>
    %c1_71 = arith.constant 1 : index
    %c1_72 = arith.constant 1 : index
    %c0_73 = arith.constant 0 : index
    %162 = vector.load %arg5[%c1_71, %c1_72, %c0_73] : memref<2x4x32xf32, #tpu.memory_space<vmem>>, vector<1x1x32xf32>
    %163 = vector.shape_cast %162 : vector<1x1x32xf32> to vector<1x32xf32>
    %c1_74 = arith.constant 1 : index
    %c2_75 = arith.constant 2 : index
    %c0_76 = arith.constant 0 : index
    %164 = vector.load %arg5[%c1_74, %c2_75, %c0_76] : memref<2x4x32xf32, #tpu.memory_space<vmem>>, vector<1x1x32xf32>
    %165 = vector.shape_cast %164 : vector<1x1x32xf32> to vector<1x32xf32>
    %c1_77 = arith.constant 1 : index
    %c3_78 = arith.constant 3 : index
    %c0_79 = arith.constant 0 : index
    %166 = vector.load %arg5[%c1_77, %c3_78, %c0_79] : memref<2x4x32xf32, #tpu.memory_space<vmem>>, vector<1x1x32xf32>
    %167 = vector.shape_cast %166 : vector<1x1x32xf32> to vector<1x32xf32>
    %c1_80 = arith.constant 1 : index
    %c0_81 = arith.constant 0 : index
    %c0_82 = arith.constant 0 : index
    %168 = vector.load %arg8[%c1_80, %c0_81, %c0_82] : memref<2x4x128xf32, #tpu.memory_space<vmem>>, vector<1x1x96xf32>
    %169 = vector.shape_cast %168 : vector<1x1x96xf32> to vector<1x96xf32>
    %c1_83 = arith.constant 1 : index
    %c1_84 = arith.constant 1 : index
    %c0_85 = arith.constant 0 : index
    %170 = vector.load %arg8[%c1_83, %c1_84, %c0_85] : memref<2x4x128xf32, #tpu.memory_space<vmem>>, vector<1x1x32xf32>
    %171 = vector.shape_cast %170 : vector<1x1x32xf32> to vector<1x32xf32>
    %c1_86 = arith.constant 1 : index
    %c2_87 = arith.constant 2 : index
    %c0_88 = arith.constant 0 : index
    %172 = vector.load %arg8[%c1_86, %c2_87, %c0_88] : memref<2x4x128xf32, #tpu.memory_space<vmem>>, vector<1x1x128xf32>
    %173 = vector.shape_cast %172 : vector<1x1x128xf32> to vector<1x128xf32>
    %c1_89 = arith.constant 1 : index
    %c3_90 = arith.constant 3 : index
    %c0_91 = arith.constant 0 : index
    %174 = vector.load %arg8[%c1_89, %c3_90, %c0_91] : memref<2x4x128xf32, #tpu.memory_space<vmem>>, vector<1x1x32xf32>
    %175 = vector.shape_cast %174 : vector<1x1x32xf32> to vector<1x32xf32>
    %cst_92 = arith.constant dense<0.000000e+00> : vector<16xf32>
    %176 = vector.multi_reduction <add>, %159, %cst_92 [1] : vector<16x32xf32> to vector<16xf32>
    %177 = vector.shape_cast %176 : vector<16xf32> to vector<16x1xf32>
    %cst_93 = arith.constant 3.200000e+01 : f32
    %178 = vector.broadcast %cst_93 : f32 to vector<16x1xf32>
    %179 = arith.divf %177, %178 : vector<16x1xf32>
    %180 = vector.broadcast %179 : vector<16x1xf32> to vector<16x32xf32>
    %181 = arith.subf %159, %180 : vector<16x32xf32>
    %182 = arith.mulf %181, %181 : vector<16x32xf32>
    %cst_94 = arith.constant dense<0.000000e+00> : vector<16xf32>
    %183 = vector.multi_reduction <add>, %182, %cst_94 [1] : vector<16x32xf32> to vector<16xf32>
    %184 = vector.shape_cast %183 : vector<16xf32> to vector<16x1xf32>
    %cst_95 = arith.constant 3.200000e+01 : f32
    %185 = vector.broadcast %cst_95 : f32 to vector<16x1xf32>
    %186 = arith.divf %184, %185 : vector<16x1xf32>
    %187 = vector.broadcast %179 : vector<16x1xf32> to vector<16x32xf32>
    %188 = arith.subf %159, %187 : vector<16x32xf32>
    %cst_96 = arith.constant 9.99999974E-6 : f32
    %189 = vector.broadcast %cst_96 : f32 to vector<16x1xf32>
    %190 = arith.addf %186, %189 : vector<16x1xf32>
    %191 = math.rsqrt %190 : vector<16x1xf32>
    %192 = vector.broadcast %191 : vector<16x1xf32> to vector<16x32xf32>
    %193 = arith.mulf %188, %192 : vector<16x32xf32>
    %194 = vector.broadcast %161 : vector<1x32xf32> to vector<16x32xf32>
    %195 = arith.mulf %193, %194 : vector<16x32xf32>
    %196 = vector.broadcast %163 : vector<1x32xf32> to vector<16x32xf32>
    %197 = arith.addf %195, %196 : vector<16x32xf32>
    %198 = arith.truncf %197 : vector<16x32xf32> to vector<16x32xbf16>
    %c1_97 = arith.constant 1 : index
    %c0_98 = arith.constant 0 : index
    %c0_99 = arith.constant 0 : index
    %199 = vector.load %arg6[%c1_97, %c0_98, %c0_99] : memref<2x32x96xbf16, #tpu.memory_space<vmem>>, vector<1x32x96xbf16>
    %200 = vector.shape_cast %199 : vector<1x32x96xbf16> to vector<32x96xbf16>
    %cst_100 = arith.constant dense<0.000000e+00> : vector<16x96xf32>
    %201 = tpu.matmul %198, %200, %cst_100 {dimension_numbers = #tpu.dot_dimension_numbers<[1], [0], [0], [1], [0, 0, 1, 1], [], []>} : vector<16x32xbf16>, vector<32x96xbf16>, vector<16x96xf32> -> vector<16x96xf32>
    %202 = vector.broadcast %169 : vector<1x96xf32> to vector<16x96xf32>
    %203 = arith.addf %201, %202 : vector<16x96xf32>
    %204 = vector.extract_strided_slice %203 {offsets = [0, 0], sizes = [16, 16], strides = [1, 1]} : vector<16x96xf32> to vector<16x16xf32>
    %205 = vector.shape_cast %204 : vector<16x16xf32> to vector<2x8x16xf32>
    %206 = vector.extract_strided_slice %203 {offsets = [0, 16], sizes = [16, 16], strides = [1, 1]} : vector<16x96xf32> to vector<16x16xf32>
    %207 = vector.shape_cast %206 : vector<16x16xf32> to vector<2x8x16xf32>
    %208 = tpu.concatenate %205, %207 in 0 : vector<2x8x16xf32>, vector<2x8x16xf32> -> vector<4x8x16xf32>
    %209 = vector.extract_strided_slice %203 {offsets = [0, 32], sizes = [16, 16], strides = [1, 1]} : vector<16x96xf32> to vector<16x16xf32>
    %210 = vector.shape_cast %209 : vector<16x16xf32> to vector<2x8x16xf32>
    %211 = vector.extract_strided_slice %203 {offsets = [0, 48], sizes = [16, 16], strides = [1, 1]} : vector<16x96xf32> to vector<16x16xf32>
    %212 = vector.shape_cast %211 : vector<16x16xf32> to vector<2x8x16xf32>
    %213 = tpu.concatenate %210, %212 in 0 : vector<2x8x16xf32>, vector<2x8x16xf32> -> vector<4x8x16xf32>
    %214 = vector.extract_strided_slice %203 {offsets = [0, 64], sizes = [16, 16], strides = [1, 1]} : vector<16x96xf32> to vector<16x16xf32>
    %215 = vector.shape_cast %214 : vector<16x16xf32> to vector<2x8x16xf32>
    %216 = vector.extract_strided_slice %203 {offsets = [0, 80], sizes = [16, 16], strides = [1, 1]} : vector<16x96xf32> to vector<16x16xf32>
    %217 = vector.shape_cast %216 : vector<16x16xf32> to vector<2x8x16xf32>
    %218 = tpu.concatenate %215, %217 in 0 : vector<2x8x16xf32>, vector<2x8x16xf32> -> vector<4x8x16xf32>
    %219 = arith.truncf %208 : vector<4x8x16xf32> to vector<4x8x16xbf16>
    %220 = arith.truncf %213 : vector<4x8x16xf32> to vector<4x8x16xbf16>
    "tpu.trace_start"() <{level = 10 : i32, message = "bqd,bkd->bqk"}> : () -> ()
    %cst_101 = arith.constant dense<0.000000e+00> : vector<4x8x8xf32>
    %221 = tpu.matmul %219, %220, %cst_101 {dimension_numbers = #tpu.dot_dimension_numbers<[2], [2], [1], [1], [0, 0, 0, 1, 1, 1], [0], [0]>} : vector<4x8x16xbf16>, vector<4x8x16xbf16>, vector<4x8x8xf32> -> vector<4x8x8xf32>
    "tpu.trace_stop"() : () -> ()
    %cst_102 = arith.constant 2.500000e-01 : f32
    %222 = vector.broadcast %cst_102 : f32 to vector<4x8x8xf32>
    %223 = arith.mulf %221, %222 : vector<4x8x8xf32>
    %cst_103 = arith.constant -1.000000e+30 : f32
    %224 = vector.shape_cast %18 : vector<1x8x8xi1> to vector<1x8x8xi1>
    %225 = vector.broadcast %224 : vector<1x8x8xi1> to vector<4x8x8xi1>
    %226 = vector.broadcast %cst_103 : f32 to vector<4x8x8xf32>
    %227 = arith.select %225, %223, %226 : vector<4x8x8xi1>, vector<4x8x8xf32>
    %cst_104 = arith.constant dense<0xFF800000> : vector<4x8xf32>
    %228 = vector.multi_reduction <maximumf>, %227, %cst_104 [2] : vector<4x8x8xf32> to vector<4x8xf32>
    %229 = vector.shape_cast %228 : vector<4x8xf32> to vector<4x8x1xf32>
    %230 = vector.broadcast %229 : vector<4x8x1xf32> to vector<4x8x8xf32>
    %231 = arith.subf %227, %230 : vector<4x8x8xf32>
    %232 = math.exp %231 : vector<4x8x8xf32>
    %cst_105 = arith.constant dense<0.000000e+00> : vector<4x8xf32>
    %233 = vector.multi_reduction <add>, %232, %cst_105 [2] : vector<4x8x8xf32> to vector<4x8xf32>
    %234 = vector.shape_cast %233 : vector<4x8xf32> to vector<4x8x1xf32>
    %235 = tpu.reciprocal %234 {approx = true} : vector<4x8x1xf32> -> vector<4x8x1xf32>
    %236 = vector.broadcast %235 : vector<4x8x1xf32> to vector<4x8x8xf32>
    %237 = arith.mulf %232, %236 : vector<4x8x8xf32>
    %238 = arith.truncf %237 : vector<4x8x8xf32> to vector<4x8x8xbf16>
    %239 = arith.truncf %218 : vector<4x8x16xf32> to vector<4x8x16xbf16>
    "tpu.trace_start"() <{level = 10 : i32, message = "bqk,bkd->bqd"}> : () -> ()
    %cst_106 = arith.constant dense<0.000000e+00> : vector<4x8x16xf32>
    %240 = tpu.matmul %238, %239, %cst_106 {dimension_numbers = #tpu.dot_dimension_numbers<[2], [1], [1], [2], [0, 0, 0, 1, 1, 2], [0], [0]>} : vector<4x8x8xbf16>, vector<4x8x16xbf16>, vector<4x8x16xf32> -> vector<4x8x16xf32>
    "tpu.trace_stop"() : () -> ()
    %241 = vector.extract_strided_slice %240 {offsets = [0, 0, 0], sizes = [2, 8, 16], strides = [1, 1, 1]} : vector<4x8x16xf32> to vector<2x8x16xf32>
    %242 = vector.shape_cast %241 : vector<2x8x16xf32> to vector<16x16xf32>
    %243 = vector.extract_strided_slice %240 {offsets = [2, 0, 0], sizes = [2, 8, 16], strides = [1, 1, 1]} : vector<4x8x16xf32> to vector<2x8x16xf32>
    %244 = vector.shape_cast %243 : vector<2x8x16xf32> to vector<16x16xf32>
    %245 = tpu.concatenate %242, %244 in 1 : vector<16x16xf32>, vector<16x16xf32> -> vector<16x32xf32>
    %246 = arith.truncf %245 : vector<16x32xf32> to vector<16x32xbf16>
    %c1_107 = arith.constant 1 : index
    %c0_108 = arith.constant 0 : index
    %c0_109 = arith.constant 0 : index
    %247 = vector.load %arg7[%c1_107, %c0_108, %c0_109] : memref<2x32x32xbf16, #tpu.memory_space<vmem>>, vector<1x32x32xbf16>
    %248 = vector.shape_cast %247 : vector<1x32x32xbf16> to vector<32x32xbf16>
    %cst_110 = arith.constant dense<0.000000e+00> : vector<16x32xf32>
    %249 = tpu.matmul %246, %248, %cst_110 {dimension_numbers = #tpu.dot_dimension_numbers<[1], [0], [0], [1], [0, 0, 1, 1], [], []>} : vector<16x32xbf16>, vector<32x32xbf16>, vector<16x32xf32> -> vector<16x32xf32>
    %250 = vector.broadcast %171 : vector<1x32xf32> to vector<16x32xf32>
    %251 = arith.addf %249, %250 : vector<16x32xf32>
    %252 = arith.addf %159, %251 : vector<16x32xf32>
    %cst_111 = arith.constant dense<0.000000e+00> : vector<16xf32>
    %253 = vector.multi_reduction <add>, %252, %cst_111 [1] : vector<16x32xf32> to vector<16xf32>
    %254 = vector.shape_cast %253 : vector<16xf32> to vector<16x1xf32>
    %cst_112 = arith.constant 3.200000e+01 : f32
    %255 = vector.broadcast %cst_112 : f32 to vector<16x1xf32>
    %256 = arith.divf %254, %255 : vector<16x1xf32>
    %257 = vector.broadcast %256 : vector<16x1xf32> to vector<16x32xf32>
    %258 = arith.subf %252, %257 : vector<16x32xf32>
    %259 = arith.mulf %258, %258 : vector<16x32xf32>
    %cst_113 = arith.constant dense<0.000000e+00> : vector<16xf32>
    %260 = vector.multi_reduction <add>, %259, %cst_113 [1] : vector<16x32xf32> to vector<16xf32>
    %261 = vector.shape_cast %260 : vector<16xf32> to vector<16x1xf32>
    %cst_114 = arith.constant 3.200000e+01 : f32
    %262 = vector.broadcast %cst_114 : f32 to vector<16x1xf32>
    %263 = arith.divf %261, %262 : vector<16x1xf32>
    %264 = vector.broadcast %256 : vector<16x1xf32> to vector<16x32xf32>
    %265 = arith.subf %252, %264 : vector<16x32xf32>
    %cst_115 = arith.constant 9.99999974E-6 : f32
    %266 = vector.broadcast %cst_115 : f32 to vector<16x1xf32>
    %267 = arith.addf %263, %266 : vector<16x1xf32>
    %268 = math.rsqrt %267 : vector<16x1xf32>
    %269 = vector.broadcast %268 : vector<16x1xf32> to vector<16x32xf32>
    %270 = arith.mulf %265, %269 : vector<16x32xf32>
    %271 = vector.broadcast %165 : vector<1x32xf32> to vector<16x32xf32>
    %272 = arith.mulf %270, %271 : vector<16x32xf32>
    %273 = vector.broadcast %167 : vector<1x32xf32> to vector<16x32xf32>
    %274 = arith.addf %272, %273 : vector<16x32xf32>
    %275 = arith.truncf %274 : vector<16x32xf32> to vector<16x32xbf16>
    %c1_116 = arith.constant 1 : index
    %c0_117 = arith.constant 0 : index
    %c0_118 = arith.constant 0 : index
    %276 = vector.load %arg9[%c1_116, %c0_117, %c0_118] : memref<2x32x128xbf16, #tpu.memory_space<vmem>>, vector<1x32x128xbf16>
    %277 = vector.shape_cast %276 : vector<1x32x128xbf16> to vector<32x128xbf16>
    %cst_119 = arith.constant dense<0.000000e+00> : vector<16x128xf32>
    %278 = tpu.matmul %275, %277, %cst_119 {dimension_numbers = #tpu.dot_dimension_numbers<[1], [0], [0], [1], [0, 0, 1, 1], [], []>} : vector<16x32xbf16>, vector<32x128xbf16>, vector<16x128xf32> -> vector<16x128xf32>
    %279 = vector.broadcast %173 : vector<1x128xf32> to vector<16x128xf32>
    %280 = arith.addf %278, %279 : vector<16x128xf32>
    %cst_120 = arith.constant 5.000000e-01 : f32
    %281 = vector.broadcast %cst_120 : f32 to vector<16x128xf32>
    %282 = arith.mulf %281, %280 : vector<16x128xf32>
    %283 = arith.mulf %280, %280 : vector<16x128xf32>
    %284 = arith.mulf %283, %280 : vector<16x128xf32>
    %cst_121 = arith.constant 4.471500e-02 : f32
    %285 = vector.broadcast %cst_121 : f32 to vector<16x128xf32>
    %286 = arith.mulf %285, %284 : vector<16x128xf32>
    %287 = arith.addf %280, %286 : vector<16x128xf32>
    %cst_122 = arith.constant 0.797884583 : f32
    %288 = vector.broadcast %cst_122 : f32 to vector<16x128xf32>
    %289 = arith.mulf %288, %287 : vector<16x128xf32>
    %290 = math.tanh %289 : vector<16x128xf32>
    %cst_123 = arith.constant 1.000000e+00 : f32
    %291 = vector.broadcast %cst_123 : f32 to vector<16x128xf32>
    %292 = arith.addf %291, %290 : vector<16x128xf32>
    %293 = arith.mulf %282, %292 : vector<16x128xf32>
    %294 = arith.truncf %293 : vector<16x128xf32> to vector<16x128xbf16>
    %c1_124 = arith.constant 1 : index
    %c0_125 = arith.constant 0 : index
    %c0_126 = arith.constant 0 : index
    %295 = vector.load %arg10[%c1_124, %c0_125, %c0_126] : memref<2x128x32xbf16, #tpu.memory_space<vmem>>, vector<1x128x32xbf16>
    %296 = vector.shape_cast %295 : vector<1x128x32xbf16> to vector<128x32xbf16>
    %cst_127 = arith.constant dense<0.000000e+00> : vector<16x32xf32>
    %297 = tpu.matmul %294, %296, %cst_127 {dimension_numbers = #tpu.dot_dimension_numbers<[1], [0], [0], [1], [0, 0, 1, 1], [], []>} : vector<16x128xbf16>, vector<128x32xbf16>, vector<16x32xf32> -> vector<16x32xf32>
    %298 = arith.addf %252, %297 : vector<16x32xf32>
    %299 = vector.broadcast %175 : vector<1x32xf32> to vector<16x32xf32>
    %300 = arith.addf %298, %299 : vector<16x32xf32>
    %cst_128 = arith.constant dense<0.000000e+00> : vector<16xf32>
    %301 = vector.multi_reduction <add>, %300, %cst_128 [1] : vector<16x32xf32> to vector<16xf32>
    %302 = vector.shape_cast %301 : vector<16xf32> to vector<16x1xf32>
    %cst_129 = arith.constant 3.200000e+01 : f32
    %303 = vector.broadcast %cst_129 : f32 to vector<16x1xf32>
    %304 = arith.divf %302, %303 : vector<16x1xf32>
    %305 = vector.broadcast %304 : vector<16x1xf32> to vector<16x32xf32>
    %306 = arith.subf %300, %305 : vector<16x32xf32>
    %307 = arith.mulf %306, %306 : vector<16x32xf32>
    %cst_130 = arith.constant dense<0.000000e+00> : vector<16xf32>
    %308 = vector.multi_reduction <add>, %307, %cst_130 [1] : vector<16x32xf32> to vector<16xf32>
    %309 = vector.shape_cast %308 : vector<16xf32> to vector<16x1xf32>
    %cst_131 = arith.constant 3.200000e+01 : f32
    %310 = vector.broadcast %cst_131 : f32 to vector<16x1xf32>
    %311 = arith.divf %309, %310 : vector<16x1xf32>
    %312 = vector.broadcast %304 : vector<16x1xf32> to vector<16x32xf32>
    %313 = arith.subf %300, %312 : vector<16x32xf32>
    %cst_132 = arith.constant 9.99999974E-6 : f32
    %314 = vector.broadcast %cst_132 : f32 to vector<16x1xf32>
    %315 = arith.addf %311, %314 : vector<16x1xf32>
    %316 = math.rsqrt %315 : vector<16x1xf32>
    %317 = vector.broadcast %316 : vector<16x1xf32> to vector<16x32xf32>
    %318 = arith.mulf %313, %317 : vector<16x32xf32>
    %319 = vector.broadcast %1 : vector<1x32xf32> to vector<16x32xf32>
    %320 = arith.mulf %318, %319 : vector<16x32xf32>
    %321 = vector.broadcast %2 : vector<1x32xf32> to vector<16x32xf32>
    %322 = arith.addf %320, %321 : vector<16x32xf32>
    %c0_133 = arith.constant 0 : index
    %c0_134 = arith.constant 0 : index
    %323 = vector.load %arg11[%c0_133, %c0_134] : memref<16x32xf32, #tpu.memory_space<vmem>>, vector<16x32xf32>
    tpu.vector_store %arg11[%c0_133, %c0_134], %322 {strides = array<i32>} : memref<16x32xf32, #tpu.memory_space<vmem>>, vector<16x32xf32>,
    return
  }
  func.func @transform_0(%arg0: i32) -> (i32, i32) {
    %c0_i32 = arith.constant 0 : i32
    %c0_i32_0 = arith.constant 0 : i32
    return %arg0, %c0_i32 : i32, i32
  }
  func.func @transform_1(%arg0: i32) -> (i32, i32) {
    %c0_i32 = arith.constant 0 : i32
    %c0_i32_0 = arith.constant 0 : i32
    %c0_i32_1 = arith.constant 0 : i32
    return %c0_i32, %c0_i32_0 : i32, i32
  }
  func.func @transform_2(%arg0: i32) -> (i32, i32) {
    %c0_i32 = arith.constant 0 : i32
    %c0_i32_0 = arith.constant 0 : i32
    %c0_i32_1 = arith.constant 0 : i32
    return %c0_i32, %c0_i32_0 : i32, i32
  }
  func.func @transform_3(%arg0: i32) -> (i32, i32) {
    %c0_i32 = arith.constant 0 : i32
    %c0_i32_0 = arith.constant 0 : i32
    %c0_i32_1 = arith.constant 0 : i32
    return %c0_i32, %c0_i32_0 : i32, i32
  }
  func.func @transform_4(%arg0: i32) -> (i32, i32, i32) {
    %c0_i32 = arith.constant 0 : i32
    %c0_i32_0 = arith.constant 0 : i32
    %c0_i32_1 = arith.constant 0 : i32
    %c0_i32_2 = arith.constant 0 : i32
    return %c0_i32, %c0_i32_0, %c0_i32_1 : i32, i32, i32
  }
  func.func @transform_5(%arg0: i32) -> (i32, i32, i32) {
    %c0_i32 = arith.constant 0 : i32
    %c0_i32_0 = arith.constant 0 : i32
    %c0_i32_1 = arith.constant 0 : i32
    %c0_i32_2 = arith.constant 0 : i32
    return %c0_i32, %c0_i32_0, %c0_i32_1 : i32, i32, i32
  }
  func.func @transform_6(%arg0: i32) -> (i32, i32, i32) {
    %c0_i32 = arith.constant 0 : i32
    %c0_i32_0 = arith.constant 0 : i32
    %c0_i32_1 = arith.constant 0 : i32
    %c0_i32_2 = arith.constant 0 : i32
    return %c0_i32, %c0_i32_0, %c0_i32_1 : i32, i32, i32
  }
  func.func @transform_7(%arg0: i32) -> (i32, i32, i32) {
    %c0_i32 = arith.constant 0 : i32
    %c0_i32_0 = arith.constant 0 : i32
    %c0_i32_1 = arith.constant 0 : i32
    %c0_i32_2 = arith.constant 0 : i32
    return %c0_i32, %c0_i32_0, %c0_i32_1 : i32, i32, i32
  }
  func.func @transform_8(%arg0: i32) -> (i32, i32, i32) {
    %c0_i32 = arith.constant 0 : i32
    %c0_i32_0 = arith.constant 0 : i32
    %c0_i32_1 = arith.constant 0 : i32
    %c0_i32_2 = arith.constant 0 : i32
    return %c0_i32, %c0_i32_0, %c0_i32_1 : i32, i32, i32
  }
  func.func @transform_9(%arg0: i32) -> (i32, i32, i32) {
    %c0_i32 = arith.constant 0 : i32
    %c0_i32_0 = arith.constant 0 : i32
    %c0_i32_1 = arith.constant 0 : i32
    %c0_i32_2 = arith.constant 0 : i32
    return %c0_i32, %c0_i32_0, %c0_i32_1 : i32, i32, i32
  }
  func.func @transform_10(%arg0: i32) -> (i32, i32) {
    %c0_i32 = arith.constant 0 : i32
    %c0_i32_0 = arith.constant 0 : i32
    return %arg0, %c0_i32 : i32, i32
  }
}

</mosaic_0001>

<llo_original>
// kernel: _hidden_impl.1
$region0: #{_hidden_impl.1}
  #allocation0 [shape = 'u32[]', space=smem, size = 0x4, offset = 0x4, fixed_abs, tag = 'smem constant byte address 0x4 - core index']
  #allocation1 [shape = 'u32[144,128]{1,0:T(1,128)}', space=vmem, size = 0x12000, scoped, tag = 'internal scratch']
  %s0 = inlined_call_operand.vmem [shape: f32[16,32], index: 0, kind: input, shape index: {}]
  %s1 = inlined_call_operand.vmem [shape: bf16[32,32], index: 1, kind: input, shape index: {}]
  %s2 = inlined_call_operand.vmem [shape: f32[8,32], index: 2, kind: input, shape index: {}]
  %s3 = inlined_call_operand.vmem [shape: f32[3,32], index: 3, kind: input, shape index: {}]
  %s4 = inlined_call_operand.vmem [shape: f32[2,4,32], index: 4, kind: input, shape index: {}]
  %s5 = inlined_call_operand.vmem [shape: bf16[2,32,96], index: 5, kind: input, shape index: {}]
  %s6 = inlined_call_operand.vmem [shape: bf16[2,32,32], index: 6, kind: input, shape index: {}]
  %s7 = inlined_call_operand.vmem [shape: f32[2,4,128], index: 7, kind: input, shape index: {}]
  %s8 = inlined_call_operand.vmem [shape: bf16[2,32,128], index: 8, kind: input, shape index: {}]
  %s9 = inlined_call_operand.vmem [shape: bf16[2,128,32], index: 9, kind: input, shape index: {}]
  %s10 = inlined_call_operand.hbm [shape: f32[16,32], index: 10, kind: output, shape index: {}]
  %s11 = sld [smem:[#allocation0]]
  $region50: #{_hidden_impl.1} parent=0
    _
  %s13 = ssub.s32 1, %s11
  %s14 = scalar_select 0, %s13, %s11
  $region1: #{_hidden_impl.1} parent=0
    #allocation2 [shape = 'u8[8192]{0}', space=vmem, size = 0x2000, scoped, tag = 'output window, operand 0, single buffered']
    #allocation3 [shape = 's32[1]{0}', space=sflag, size = 0x4, scoped, tag = 'scoped memory for _hidden_impl.1']
    %15 = vsyncpa [#allocation3], 0
    // Predicated region
    $region2: #{_hidden_impl.1} parent=1 // pred_check
      _
    $region3: #{_hidden_impl.1} parent=1 // pred_check_branch
      %17 = sbr.rel (0) target = $region5
    $region4: #{_hidden_impl.1} parent=1 // pred_region
      _
    $region5: #{_hidden_impl.1} parent=1 // pred_fallthru
      _
    // Predicated region
    $region6: #{_hidden_impl.1} parent=1 // pred_check
      _
    $region7: #{_hidden_impl.1} parent=1 // pred_check_branch
      %19 = sbr.rel (0) target = $region9
    $region8: #{_hidden_impl.1} parent=1 // pred_region
      _
    $region9: #{_hidden_impl.1} parent=1 // pred_fallthru
      _
    // Predicated region
    $region10: #{_hidden_impl.1} parent=1 // pred_check
      _
    $region11: #{_hidden_impl.1} parent=1 // pred_check_branch
      %21 = sbr.rel (0) target = $region13
    $region12: #{_hidden_impl.1} parent=1 // pred_region
      _
    $region13: #{_hidden_impl.1} parent=1 // pred_fallthru
      _
    // Predicated region
    $region14: #{_hidden_impl.1} parent=1 // pred_check
      _
    $region15: #{_hidden_impl.1} parent=1 // pred_check_branch
      %23 = sbr.rel (0) target = $region17
    $region16: #{_hidden_impl.1} parent=1 // pred_region
      _
    $region17: #{_hidden_impl.1} parent=1 // pred_fallthru
      _
    // Predicated region
    $region18: #{_hidden_impl.1} parent=1 // pred_check
      _
    $region19: #{_hidden_impl.1} parent=1 // pred_check_branch
      %25 = sbr.rel (0) target = $region21
    $region20: #{_hidden_impl.1} parent=1 // pred_region
      _
    $region21: #{_hidden_impl.1} parent=1 // pred_fallthru
      _
    // Predicated region
    $region22: #{_hidden_impl.1} parent=1 // pred_check
      _
    $region23: #{_hidden_impl.1} parent=1 // pred_check_branch
      %27 = sbr.rel (0) target = $region25
    $region24: #{_hidden_impl.1} parent=1 // pred_region
      _
    $region25: #{_hidden_impl.1} parent=1 // pred_fallthru
      _
    // Predicated region
    $region26: #{_hidden_impl.1} parent=1 // pred_check
      _
    $region27: #{_hidden_impl.1} parent=1 // pred_check_branch
      %29 = sbr.rel (0) target = $region29
    $region28: #{_hidden_impl.1} parent=1 // pred_region
      _
    $region29: #{_hidden_impl.1} parent=1 // pred_fallthru
      _
    // Predicated region
    $region30: #{_hidden_impl.1} parent=1 // pred_check
      _
    $region31: #{_hidden_impl.1} parent=1 // pred_check_branch
      %31 = sbr.rel (0) target = $region33
    $region32: #{_hidden_impl.1} parent=1 // pred_region
      _
    $region33: #{_hidden_impl.1} parent=1 // pred_fallthru
      _
    // Predicated region
    $region34: #{_hidden_impl.1} parent=1 // pred_check
      _
    $region35: #{_hidden_impl.1} parent=1 // pred_check_branch
      %33 = sbr.rel (0) target = $region37
    $region36: #{_hidden_impl.1} parent=1 // pred_region
      _
    $region37: #{_hidden_impl.1} parent=1 // pred_fallthru
      _
    // Predicated region
    $region38: #{_hidden_impl.1} parent=1 // pred_check
      _
    $region39: #{_hidden_impl.1} parent=1 // pred_check_branch
      %35 = sbr.rel (0) target = $region41
    $region40: #{_hidden_impl.1} parent=1 // pred_region
      _
    $region41: #{_hidden_impl.1} parent=1 // pred_fallthru
      _
    %v37 = vld [vmem:[%s3] sm:$0x1]
    %v38 = vld [vmem:[%s3 + $0x1] sm:$0x1]
    %v39 = vld [vmem:[%s3 + $0x2] sm:$0x1]
    %v40 = vld [vmem:[%s0] sm:$0xff]
    %v41 = vld [vmem:[%s0 + $0x8] sm:$0xff]
    %v42 = vpack.c.bf16 %v41, %v40
    %v43 = vld [vmem:[%s1] sm:$0xf]
    %v44 = vld [vmem:[%s1 + $0x4] sm:$0xf]
    %v45 = vld [vmem:[%s1 + $0x8] sm:$0xf]
    %v46 = vld [vmem:[%s1 + $0xc] sm:$0xf]
    %v47 = vlaneseq
    %v48 = vshrl.u32 %v47, 7
    %v49 = vsub.s32 0, %v48
    %v50 = vrot.slane %v37, %v49
    %v55 = vunpack.c.l.b16 %v43
    %v56 = vunpack.c.l.b16 %v44
    %v57 = vunpack.c.l.b16 %v45
    %v58 = vunpack.c.l.b16 %v46
    %v59 = vpack.c.b16 %v56, %v55
    %v60 = vpack.c.b16 %v58, %v57
    %vm63 = vcmask 261120
    %v65 = vsel %vm63, %v42, 0
    %67 = vmatprep.subr.bf16.mxu0 0
    %68 = vmatpush1.bf16.msra.mxu0 %v59
    %69 = vmatprep.subr.bf16.mxu0 0
    %70 = vmatpush1.bf16.msra.mxu0 %v60
    %71 = vmatprep.subr.bf16.mxu0 0
    %72 = vmatpush1.bf16.msra.mxu0 0
    %73 = vmatprep.subr.bf16.mxu0 0
    %74 = vmatpush1.bf16.msra.mxu0 0
    %75 = vmatprep.subr.bf16.mxu0 0
    %76 = vmatpush1.bf16.msra.mxu0 0
    %77 = vmatprep.subr.bf16.mxu0 0
    %78 = vmatpush1.bf16.msra.mxu0 0
    %79 = vmatprep.subr.bf16.mxu0 0
    %80 = vmatpush1.bf16.msra.mxu0 0
    %81 = vmatprep.subr.bf16.mxu0 0
    %82 = vmatpush1.bf16.msra.mxu0 0
    %83 = vmatprep.subr.bf16.mxu0 0
    %84 = vmatpush1.bf16.msra.mxu0 0
    %85 = vmatprep.subr.bf16.mxu0 0
    %86 = vmatpush1.bf16.msra.mxu0 0
    %87 = vmatprep.subr.bf16.mxu0 0
    %88 = vmatpush1.bf16.msra.mxu0 0
    %89 = vmatprep.subr.bf16.mxu0 0
    %90 = vmatpush1.bf16.msra.mxu0 0
    %91 = vmatprep.subr.bf16.mxu0 0
    %92 = vmatpush1.bf16.msra.mxu0 0
    %93 = vmatprep.subr.bf16.mxu0 0
    %94 = vmatpush1.bf16.msra.mxu0 0
    %95 = vmatprep.subr.bf16.mxu0 0
    %96 = vmatpush1.bf16.msra.mxu0 0
    %97 = vmatprep.subr.bf16.mxu0 0
    %98 = vmatpush1.bf16.msra.mxu0 0
    %99 = vmatprep.mubr.bf16.mxu0 0
    %100 = vmatmul.mubr.bf16.gmra.mrb[0].mxu0 %v65
    %v101 = vpop.f32.mrb[0].mxu0
    %v102 = vadd.f32 %v50, %v101
    %v103 = vpop.f32.mrb[0].mxu0
    %v104 = vpop.f32.mrb[0].mxu0
    %v105 = vadd.f32 %v50, %v104
    %v106 = vpop.f32.mrb[0].mxu0
    %107 = vdwg.mxu0
    %v108 = vld [vmem:[%s2] sm:$0xff]
    %v109 = vadd.f32 %v102, %v108
    %v110 = vadd.f32 %v105, %v108
    %v111 = vlaneseq
    %v112 = vshrl.u32 %v111, 7
    %v113 = vlaneseq
    %v114 = vand.u32 %v113, 127
    %vm115 = vcmp.le.s32.totalorder %v114, %v112
    %v116 = vld [vmem:[%s4] sm:$0x1]
    %v117 = vld [vmem:[%s4 + $0x1] sm:$0x1]
    %v118 = vld [vmem:[%s4 + $0x2] sm:$0x1]
    %v119 = vld [vmem:[%s4 + $0x3] sm:$0x1]
    %v120 = vld [vmem:[%s7] sm:$0x1]
    %v121 = vld [vmem:[%s7 + $0x1] sm:$0x1]
    %v122 = vld [vmem:[%s7 + $0x2] sm:$0x1]
    %v123 = vld [vmem:[%s7 + $0x3] sm:$0x1]
    %v124 = vsel %vm63, %v109, 0.0
    %125 = vadd.xlane.f32.xlu0 %v124
    %v126 = vpop.xlane.xlu0 %125
    %v127 = vsel %vm63, %v110, 0.0
    %128 = vadd.xlane.f32.xlu0 %v127
    %v129 = vpop.xlane.xlu0 %128
    %v130 = vrcp.pop 32.0
    %v131 = vmul.f32 %v126, %v130
    %v132 = vmul.f32 %v129, %v130
    %v133 = vsub.f32 %v109, %v131
    %v134 = vsub.f32 %v110, %v132
    %v135 = vmul.f32 %v133, %v133
    %v136 = vmul.f32 %v134, %v134
    %v137 = vsel %vm63, %v135, 0.0
    %138 = vadd.xlane.f32.xlu0 %v137
    %v139 = vpop.xlane.xlu0 %138
    %v140 = vsel %vm63, %v136, 0.0
    %141 = vadd.xlane.f32.xlu0 %v140
    %v142 = vpop.xlane.xlu0 %141
    %v143 = vmul.f32 %v139, %v130
    %v144 = vmul.f32 %v142, %v130
    %v145 = vadd.f32 %v143, 1e-05
    %v146 = vadd.f32 %v144, 1e-05
    %v147 = vrsqrt.pop %v145
    %v148 = vrsqrt.pop %v146
    %v149 = vmul.f32 %v133, %v147
    %v150 = vmul.f32 %v134, %v148
    %v151 = vlaneseq
    %v152 = vshrl.u32 %v151, 7
    %v153 = vsub.s32 0, %v152
    %v154 = vrot.slane %v116, %v153
    %v155 = vmul.f32 %v149, %v154
    %v156 = vmul.f32 %v150, %v154
    %v157 = vlaneseq
    %v158 = vshrl.u32 %v157, 7
    %v159 = vsub.s32 0, %v158
    %v160 = vrot.slane %v117, %v159
    %v161 = vadd.f32 %v155, %v160
    %v162 = vadd.f32 %v156, %v160
    %v163 = vpack.c.bf16 %v162, %v161
    %v164 = vld [vmem:[%s5] sm:$0xf]
    %v165 = vld [vmem:[%s5 + $0x4] sm:$0xf]
    %v166 = vld [vmem:[%s5 + $0x8] sm:$0xf]
    %v167 = vld [vmem:[%s5 + $0xc] sm:$0xf]
    %v168 = vlaneseq
    %v169 = vshrl.u32 %v168, 7
    %v170 = vsub.s32 0, %v169
    %v171 = vrot.slane %v120, %v170
    %v176 = vunpack.c.l.b16 %v164
    %v177 = vunpack.c.l.b16 %v165
    %v178 = vunpack.c.l.b16 %v166
    %v179 = vunpack.c.l.b16 %v167
    %v180 = vpack.c.b16 %v177, %v176
    %v181 = vpack.c.b16 %v179, %v178
    %v185 = vsel %vm63, %v163, 0
    %187 = vmatprep.subr.bf16.mxu0 0
    %188 = vmatpush1.bf16.msra.mxu0 %v180
    %189 = vmatprep.subr.bf16.mxu0 0
    %190 = vmatpush1.bf16.msra.mxu0 %v181
    %191 = vmatprep.subr.bf16.mxu0 0
    %192 = vmatpush1.bf16.msra.mxu0 0
    %193 = vmatprep.subr.bf16.mxu0 0
    %194 = vmatpush1.bf16.msra.mxu0 0
    %195 = vmatprep.subr.bf16.mxu0 0
    %196 = vmatpush1.bf16.msra.mxu0 0
    %197 = vmatprep.subr.bf16.mxu0 0
    %198 = vmatpush1.bf16.msra.mxu0 0
    %199 = vmatprep.subr.bf16.mxu0 0
    %200 = vmatpush1.bf16.msra.mxu0 0
    %201 = vmatprep.subr.bf16.mxu0 0
    %202 = vmatpush1.bf16.msra.mxu0 0
    %203 = vmatprep.subr.bf16.mxu0 0
    %204 = vmatpush1.bf16.msra.mxu0 0
    %205 = vmatprep.subr.bf16.mxu0 0
    %206 = vmatpush1.bf16.msra.mxu0 0
    %207 = vmatprep.subr.bf16.mxu0 0
    %208 = vmatpush1.bf16.msra.mxu0 0
    %209 = vmatprep.subr.bf16.mxu0 0
    %210 = vmatpush1.bf16.msra.mxu0 0
    %211 = vmatprep.subr.bf16.mxu0 0
    %212 = vmatpush1.bf16.msra.mxu0 0
    %213 = vmatprep.subr.bf16.mxu0 0
    %214 = vmatpush1.bf16.msra.mxu0 0
    %215 = vmatprep.subr.bf16.mxu0 0
    %216 = vmatpush1.bf16.msra.mxu0 0
    %217 = vmatprep.subr.bf16.mxu0 0
    %218 = vmatpush1.bf16.msra.mxu0 0
    %219 = vmatprep.mubr.bf16.mxu0 0
    %220 = vmatmul.mubr.bf16.gmra.mrb[0].mxu0 %v185
    %v221 = vpop.f32.mrb[0].mxu0
    %v222 = vadd.f32 %v171, %v221
    %v223 = vpop.f32.mrb[0].mxu0
    %v224 = vpop.f32.mrb[0].mxu0
    %v225 = vadd.f32 %v171, %v224
    %v226 = vpop.f32.mrb[0].mxu0
    %227 = vdwg.mxu0
    %230 = vrot.lane.b32.xlu0 %v222, 112
    %v231 = vpop.permute.xlu0 %230
    %232 = vrot.lane.b32.xlu0 %v225, 112
    %v233 = vpop.permute.xlu0 %232
    %v236 = vpack.c.bf16 %v222, %v222
    %v237 = vpack.c.bf16 %v225, %v225
    %v238 = vpack.c.bf16 %v231, %v231
    %v239 = vpack.c.bf16 %v233, %v233
    %241 = vrot.lane.b32.xlu0 %v236, 96
    %v242 = vpop.permute.xlu0 %241
    %vm243 = vcmask 130048
    %v245 = vsel %vm243, %v236, 0
    %v248 = vsel %vm243, %v242, 0
    %250 = vmatprep.subr.bf16.mxu0 0
    %251 = vmatpush1.bf16.xpose.msra.mxu0 %v248
    %252 = vmatprep.subr.bf16.mxu0 0
    %253 = vmatpush1.bf16.xpose.msra.mxu0 0
    %254 = vmatprep.subr.bf16.mxu0 0
    %255 = vmatpush1.bf16.xpose.msra.mxu0 0
    %256 = vmatprep.subr.bf16.mxu0 0
    %257 = vmatpush1.bf16.xpose.msra.mxu0 0
    %258 = vmatprep.subr.bf16.mxu0 0
    %259 = vmatpush1.bf16.xpose.msra.mxu0 0
    %260 = vmatprep.subr.bf16.mxu0 0
    %261 = vmatpush1.bf16.xpose.msra.mxu0 0
    %262 = vmatprep.subr.bf16.mxu0 0
    %263 = vmatpush1.bf16.xpose.msra.mxu0 0
    %264 = vmatprep.subr.bf16.mxu0 0
    %265 = vmatpush1.bf16.xpose.msra.mxu0 0
    %266 = vmatprep.subr.bf16.mxu0 0
    %267 = vmatpush1.bf16.xpose.msra.mxu0 0
    %268 = vmatprep.subr.bf16.mxu0 0
    %269 = vmatpush1.bf16.xpose.msra.mxu0 0
    %270 = vmatprep.subr.bf16.mxu0 0
    %271 = vmatpush1.bf16.xpose.msra.mxu0 0
    %272 = vmatprep.subr.bf16.mxu0 0
    %273 = vmatpush1.bf16.xpose.msra.mxu0 0
    %274 = vmatprep.subr.bf16.mxu0 0
    %275 = vmatpush1.bf16.xpose.msra.mxu0 0
    %276 = vmatprep.subr.bf16.mxu0 0
    %277 = vmatpush1.bf16.xpose.msra.mxu0 0
    %278 = vmatprep.subr.bf16.mxu0 0
    %279 = vmatpush1.bf16.xpose.msra.mxu0 0
    %280 = vmatprep.subr.bf16.mxu0 0
    %281 = vmatpush1.bf16.xpose.msra.mxu0 0
    %282 = vmatprep.mubr.bf16.mxu0 0
    %283 = vmatmul.mubr.bf16.gmra.mrb[0].mxu0 %v245
    %v284 = vpop.f32.mrb[0].mxu0
    %v285 = vadd.f32 0.0, %v284
    %v286 = vpop.f32.mrb[0].mxu0
    %v287 = vpop.f32.mrb[0].mxu0
    %v288 = vpop.f32.mrb[0].mxu0
    %289 = vdwg.mxu0
    %291 = vrot.lane.b32.xlu0 %v237, 96
    %v292 = vpop.permute.xlu0 %291
    %v294 = vsel %vm243, %v237, 0
    %v297 = vsel %vm243, %v292, 0
    %299 = vmatprep.subr.bf16.mxu0 0
    %300 = vmatpush1.bf16.xpose.msra.mxu0 %v297
    %301 = vmatprep.subr.bf16.mxu0 0
    %302 = vmatpush1.bf16.xpose.msra.mxu0 0
    %303 = vmatprep.subr.bf16.mxu0 0
    %304 = vmatpush1.bf16.xpose.msra.mxu0 0
    %305 = vmatprep.subr.bf16.mxu0 0
    %306 = vmatpush1.bf16.xpose.msra.mxu0 0
    %307 = vmatprep.subr.bf16.mxu0 0
    %308 = vmatpush1.bf16.xpose.msra.mxu0 0
    %309 = vmatprep.subr.bf16.mxu0 0
    %310 = vmatpush1.bf16.xpose.msra.mxu0 0
    %311 = vmatprep.subr.bf16.mxu0 0
    %312 = vmatpush1.bf16.xpose.msra.mxu0 0
    %313 = vmatprep.subr.bf16.mxu0 0
    %314 = vmatpush1.bf16.xpose.msra.mxu0 0
    %315 = vmatprep.subr.bf16.mxu0 0
    %316 = vmatpush1.bf16.xpose.msra.mxu0 0
    %317 = vmatprep.subr.bf16.mxu0 0
    %318 = vmatpush1.bf16.xpose.msra.mxu0 0
    %319 = vmatprep.subr.bf16.mxu0 0
    %320 = vmatpush1.bf16.xpose.msra.mxu0 0
    %321 = vmatprep.subr.bf16.mxu0 0
    %322 = vmatpush1.bf16.xpose.msra.mxu0 0
    %323 = vmatprep.subr.bf16.mxu0 0
    %324 = vmatpush1.bf16.xpose.msra.mxu0 0
    %325 = vmatprep.subr.bf16.mxu0 0
    %326 = vmatpush1.bf16.xpose.msra.mxu0 0
    %327 = vmatprep.subr.bf16.mxu0 0
    %328 = vmatpush1.bf16.xpose.msra.mxu0 0
    %329 = vmatprep.subr.bf16.mxu0 0
    %330 = vmatpush1.bf16.xpose.msra.mxu0 0
    %331 = vmatprep.mubr.bf16.mxu0 0
    %332 = vmatmul.mubr.bf16.gmra.mrb[0].mxu0 %v294
    %v333 = vpop.f32.mrb[0].mxu0
    %v334 = vadd.f32 0.0, %v333
    %v335 = vpop.f32.mrb[0].mxu0
    %v336 = vpop.f32.mrb[0].mxu0
    %v337 = vpop.f32.mrb[0].mxu0
    %338 = vdwg.mxu0
    %340 = vrot.lane.b32.xlu0 %v238, 96
    %v341 = vpop.permute.xlu0 %340
    %v343 = vsel %vm243, %v238, 0
    %v346 = vsel %vm243, %v341, 0
    %348 = vmatprep.subr.bf16.mxu0 0
    %349 = vmatpush1.bf16.xpose.msra.mxu0 %v346
    %350 = vmatprep.subr.bf16.mxu0 0
    %351 = vmatpush1.bf16.xpose.msra.mxu0 0
    %352 = vmatprep.subr.bf16.mxu0 0
    %353 = vmatpush1.bf16.xpose.msra.mxu0 0
    %354 = vmatprep.subr.bf16.mxu0 0
    %355 = vmatpush1.bf16.xpose.msra.mxu0 0
    %356 = vmatprep.subr.bf16.mxu0 0
    %357 = vmatpush1.bf16.xpose.msra.mxu0 0
    %358 = vmatprep.subr.bf16.mxu0 0
    %359 = vmatpush1.bf16.xpose.msra.mxu0 0
    %360 = vmatprep.subr.bf16.mxu0 0
    %361 = vmatpush1.bf16.xpose.msra.mxu0 0
    %362 = vmatprep.subr.bf16.mxu0 0
    %363 = vmatpush1.bf16.xpose.msra.mxu0 0
    %364 = vmatprep.subr.bf16.mxu0 0
    %365 = vmatpush1.bf16.xpose.msra.mxu0 0
    %366 = vmatprep.subr.bf16.mxu0 0
    %367 = vmatpush1.bf16.xpose.msra.mxu0 0
    %368 = vmatprep.subr.bf16.mxu0 0
    %369 = vmatpush1.bf16.xpose.msra.mxu0 0
    %370 = vmatprep.subr.bf16.mxu0 0
    %371 = vmatpush1.bf16.xpose.msra.mxu0 0
    %372 = vmatprep.subr.bf16.mxu0 0
    %373 = vmatpush1.bf16.xpose.msra.mxu0 0
    %374 = vmatprep.subr.bf16.mxu0 0
    %375 = vmatpush1.bf16.xpose.msra.mxu0 0
    %376 = vmatprep.subr.bf16.mxu0 0
    %377 = vmatpush1.bf16.xpose.msra.mxu0 0
    %378 = vmatprep.subr.bf16.mxu0 0
    %379 = vmatpush1.bf16.xpose.msra.mxu0 0
    %380 = vmatprep.mubr.bf16.mxu0 0
    %381 = vmatmul.mubr.bf16.gmra.mrb[0].mxu0 %v343
    %v382 = vpop.f32.mrb[0].mxu0
    %v383 = vadd.f32 0.0, %v382
    %v384 = vpop.f32.mrb[0].mxu0
    %v385 = vpop.f32.mrb[0].mxu0
    %v386 = vpop.f32.mrb[0].mxu0
    %387 = vdwg.mxu0
    %389 = vrot.lane.b32.xlu0 %v239, 96
    %v390 = vpop.permute.xlu0 %389
    %v392 = vsel %vm243, %v239, 0
    %v395 = vsel %vm243, %v390, 0
    %397 = vmatprep.subr.bf16.mxu0 0
    %398 = vmatpush1.bf16.xpose.msra.mxu0 %v395
    %399 = vmatprep.subr.bf16.mxu0 0
    %400 = vmatpush1.bf16.xpose.msra.mxu0 0
    %401 = vmatprep.subr.bf16.mxu0 0
    %402 = vmatpush1.bf16.xpose.msra.mxu0 0
    %403 = vmatprep.subr.bf16.mxu0 0
    %404 = vmatpush1.bf16.xpose.msra.mxu0 0
    %405 = vmatprep.subr.bf16.mxu0 0
    %406 = vmatpush1.bf16.xpose.msra.mxu0 0
    %407 = vmatprep.subr.bf16.mxu0 0
    %408 = vmatpush1.bf16.xpose.msra.mxu0 0
    %409 = vmatprep.subr.bf16.mxu0 0
    %410 = vmatpush1.bf16.xpose.msra.mxu0 0
    %411 = vmatprep.subr.bf16.mxu0 0
    %412 = vmatpush1.bf16.xpose.msra.mxu0 0
    %413 = vmatprep.subr.bf16.mxu0 0
    %414 = vmatpush1.bf16.xpose.msra.mxu0 0
    %415 = vmatprep.subr.bf16.mxu0 0
    %416 = vmatpush1.bf16.xpose.msra.mxu0 0
    %417 = vmatprep.subr.bf16.mxu0 0
    %418 = vmatpush1.bf16.xpose.msra.mxu0 0
    %419 = vmatprep.subr.bf16.mxu0 0
    %420 = vmatpush1.bf16.xpose.msra.mxu0 0
    %421 = vmatprep.subr.bf16.mxu0 0
    %422 = vmatpush1.bf16.xpose.msra.mxu0 0
    %423 = vmatprep.subr.bf16.mxu0 0
    %424 = vmatpush1.bf16.xpose.msra.mxu0 0
    %425 = vmatprep.subr.bf16.mxu0 0
    %426 = vmatpush1.bf16.xpose.msra.mxu0 0
    %427 = vmatprep.subr.bf16.mxu0 0
    %428 = vmatpush1.bf16.xpose.msra.mxu0 0
    %429 = vmatprep.mubr.bf16.mxu0 0
    %430 = vmatmul.mubr.bf16.gmra.mrb[0].mxu0 %v392
    %v431 = vpop.f32.mrb[0].mxu0
    %v432 = vadd.f32 0.0, %v431
    %v433 = vpop.f32.mrb[0].mxu0
    %v434 = vpop.f32.mrb[0].mxu0
    %v435 = vpop.f32.mrb[0].mxu0
    %436 = vdwg.mxu0
    %v437 = vmul.f32 %v285, 0.25
    %v438 = vmul.f32 %v334, 0.25
    %v439 = vmul.f32 %v383, 0.25
    %v440 = vmul.f32 %v432, 0.25
    %v441 = vsel %vm115, 1, 0
    %vm442 = vcmp.eq.s32.totalorder %v441, 1
    %v443 = vsel %vm442, %v437, -1e+30
    %v444 = vsel %vm442, %v438, -1e+30
    %v445 = vsel %vm442, %v439, -1e+30
    %v446 = vsel %vm442, %v440, -1e+30
    %vm447 = vcmask 64512
    %v448 = vsel %vm447, %v443, -inf
    %449 = vmax.xlane.f32.xlu0 %v448
    %v450 = vpop.xlane.xlu0 %449
    %v451 = vsel %vm447, %v444, -inf
    %452 = vmax.xlane.f32.xlu0 %v451
    %v453 = vpop.xlane.xlu0 %452
    %v454 = vsel %vm447, %v445, -inf
    %455 = vmax.xlane.f32.xlu0 %v454
    %v456 = vpop.xlane.xlu0 %455
    %v457 = vsel %vm447, %v446, -inf
    %458 = vmax.xlane.f32.xlu0 %v457
    %v459 = vpop.xlane.xlu0 %458
    %v460 = vsub.f32 %v443, %v450
    %v461 = vsub.f32 %v444, %v453
    %v462 = vsub.f32 %v445, %v456
    %v463 = vsub.f32 %v446, %v459
    %v464 = vmul.f32 %v460, 1.442695
    %v465 = vpow.pop %v464
    %v466 = vmul.f32 %v461, 1.442695
    %v467 = vpow.pop %v466
    %v468 = vmul.f32 %v462, 1.442695
    %v469 = vpow.pop %v468
    %v470 = vmul.f32 %v463, 1.442695
    %v471 = vpow.pop %v470
    %v472 = vsel %vm447, %v465, 0.0
    %473 = vadd.xlane.f32.xlu0 %v472
    %v474 = vpop.xlane.xlu0 %473
    %v475 = vsel %vm447, %v467, 0.0
    %476 = vadd.xlane.f32.xlu0 %v475
    %v477 = vpop.xlane.xlu0 %476
    %v478 = vsel %vm447, %v469, 0.0
    %479 = vadd.xlane.f32.xlu0 %v478
    %v480 = vpop.xlane.xlu0 %479
    %v481 = vsel %vm447, %v471, 0.0
    %482 = vadd.xlane.f32.xlu0 %v481
    %v483 = vpop.xlane.xlu0 %482
    %v484 = vrcp.pop %v474
    %v485 = vrcp.pop %v477
    %v486 = vrcp.pop %v480
    %v487 = vrcp.pop %v483
    %v488 = vmul.f32 %v465, %v484
    %v489 = vmul.f32 %v467, %v485
    %v490 = vmul.f32 %v469, %v486
    %v491 = vmul.f32 %v471, %v487
    %v492 = vpack.c.bf16 %v488, %v488
    %v493 = vpack.c.bf16 %v489, %v489
    %v494 = vpack.c.bf16 %v490, %v490
    %v495 = vpack.c.bf16 %v491, %v491
    %496 = vrot.lane.b32.xlu0 %v236, 64
    %v497 = vpop.permute.xlu0 %496
    %v499 = vsel %vm447, %v492, 0
    %vm501 = vcmask 1043456
    %v503 = vsel %vm501, %v497, 0
    %505 = vmatprep.subr.bf16.mxu0 0
    %506 = vmatpush1.bf16.msra.mxu0 %v503
    %507 = vmatprep.subr.bf16.mxu0 0
    %508 = vmatpush1.bf16.msra.mxu0 0
    %509 = vmatprep.subr.bf16.mxu0 0
    %510 = vmatpush1.bf16.msra.mxu0 0
    %511 = vmatprep.subr.bf16.mxu0 0
    %512 = vmatpush1.bf16.msra.mxu0 0
    %513 = vmatprep.subr.bf16.mxu0 0
    %514 = vmatpush1.bf16.msra.mxu0 0
    %515 = vmatprep.subr.bf16.mxu0 0
    %516 = vmatpush1.bf16.msra.mxu0 0
    %517 = vmatprep.subr.bf16.mxu0 0
    %518 = vmatpush1.bf16.msra.mxu0 0
    %519 = vmatprep.subr.bf16.mxu0 0
    %520 = vmatpush1.bf16.msra.mxu0 0
    %521 = vmatprep.subr.bf16.mxu0 0
    %522 = vmatpush1.bf16.msra.mxu0 0
    %523 = vmatprep.subr.bf16.mxu0 0
    %524 = vmatpush1.bf16.msra.mxu0 0
    %525 = vmatprep.subr.bf16.mxu0 0
    %526 = vmatpush1.bf16.msra.mxu0 0
    %527 = vmatprep.subr.bf16.mxu0 0
    %528 = vmatpush1.bf16.msra.mxu0 0
    %529 = vmatprep.subr.bf16.mxu0 0
    %530 = vmatpush1.bf16.msra.mxu0 0
    %531 = vmatprep.subr.bf16.mxu0 0
    %532 = vmatpush1.bf16.msra.mxu0 0
    %533 = vmatprep.subr.bf16.mxu0 0
    %534 = vmatpush1.bf16.msra.mxu0 0
    %535 = vmatprep.subr.bf16.mxu0 0
    %536 = vmatpush1.bf16.msra.mxu0 0
    %537 = vmatprep.mubr.bf16.mxu0 0
    %538 = vmatmul.mubr.bf16.gmra.mrb[0].mxu0 %v499
    %v539 = vpop.f32.mrb[0].mxu0
    %v540 = vadd.f32 0.0, %v539
    %v541 = vpop.f32.mrb[0].mxu0
    %v542 = vpop.f32.mrb[0].mxu0
    %v543 = vpop.f32.mrb[0].mxu0
    %544 = vdwg.mxu0
    %545 = vrot.lane.b32.xlu0 %v237, 64
    %v546 = vpop.permute.xlu0 %545
    %v548 = vsel %vm447, %v493, 0
    %v551 = vsel %vm501, %v546, 0
    %553 = vmatprep.subr.bf16.mxu0 0
    %554 = vmatpush1.bf16.msra.mxu0 %v551
    %555 = vmatprep.subr.bf16.mxu0 0
    %556 = vmatpush1.bf16.msra.mxu0 0
    %557 = vmatprep.subr.bf16.mxu0 0
    %558 = vmatpush1.bf16.msra.mxu0 0
    %559 = vmatprep.subr.bf16.mxu0 0
    %560 = vmatpush1.bf16.msra.mxu0 0
    %561 = vmatprep.subr.bf16.mxu0 0
    %562 = vmatpush1.bf16.msra.mxu0 0
    %563 = vmatprep.subr.bf16.mxu0 0
    %564 = vmatpush1.bf16.msra.mxu0 0
    %565 = vmatprep.subr.bf16.mxu0 0
    %566 = vmatpush1.bf16.msra.mxu0 0
    %567 = vmatprep.subr.bf16.mxu0 0
    %568 = vmatpush1.bf16.msra.mxu0 0
    %569 = vmatprep.subr.bf16.mxu0 0
    %570 = vmatpush1.bf16.msra.mxu0 0
    %571 = vmatprep.subr.bf16.mxu0 0
    %572 = vmatpush1.bf16.msra.mxu0 0
    %573 = vmatprep.subr.bf16.mxu0 0
    %574 = vmatpush1.bf16.msra.mxu0 0
    %575 = vmatprep.subr.bf16.mxu0 0
    %576 = vmatpush1.bf16.msra.mxu0 0
    %577 = vmatprep.subr.bf16.mxu0 0
    %578 = vmatpush1.bf16.msra.mxu0 0
    %579 = vmatprep.subr.bf16.mxu0 0
    %580 = vmatpush1.bf16.msra.mxu0 0
    %581 = vmatprep.subr.bf16.mxu0 0
    %582 = vmatpush1.bf16.msra.mxu0 0
    %583 = vmatprep.subr.bf16.mxu0 0
    %584 = vmatpush1.bf16.msra.mxu0 0
    %585 = vmatprep.mubr.bf16.mxu0 0
    %586 = vmatmul.mubr.bf16.gmra.mrb[0].mxu0 %v548
    %v587 = vpop.f32.mrb[0].mxu0
    %v588 = vadd.f32 0.0, %v587
    %v589 = vpop.f32.mrb[0].mxu0
    %v590 = vpop.f32.mrb[0].mxu0
    %v591 = vpop.f32.mrb[0].mxu0
    %592 = vdwg.mxu0
    %593 = vrot.lane.b32.xlu0 %v238, 64
    %v594 = vpop.permute.xlu0 %593
    %v596 = vsel %vm447, %v494, 0
    %v599 = vsel %vm501, %v594, 0
    %601 = vmatprep.subr.bf16.mxu0 0
    %602 = vmatpush1.bf16.msra.mxu0 %v599
    %603 = vmatprep.subr.bf16.mxu0 0
    %604 = vmatpush1.bf16.msra.mxu0 0
    %605 = vmatprep.subr.bf16.mxu0 0
    %606 = vmatpush1.bf16.msra.mxu0 0
    %607 = vmatprep.subr.bf16.mxu0 0
    %608 = vmatpush1.bf16.msra.mxu0 0
    %609 = vmatprep.subr.bf16.mxu0 0
    %610 = vmatpush1.bf16.msra.mxu0 0
    %611 = vmatprep.subr.bf16.mxu0 0
    %612 = vmatpush1.bf16.msra.mxu0 0
    %613 = vmatprep.subr.bf16.mxu0 0
    %614 = vmatpush1.bf16.msra.mxu0 0
    %615 = vmatprep.subr.bf16.mxu0 0
    %616 = vmatpush1.bf16.msra.mxu0 0
    %617 = vmatprep.subr.bf16.mxu0 0
    %618 = vmatpush1.bf16.msra.mxu0 0
    %619 = vmatprep.subr.bf16.mxu0 0
    %620 = vmatpush1.bf16.msra.mxu0 0
    %621 = vmatprep.subr.bf16.mxu0 0
    %622 = vmatpush1.bf16.msra.mxu0 0
    %623 = vmatprep.subr.bf16.mxu0 0
    %624 = vmatpush1.bf16.msra.mxu0 0
    %625 = vmatprep.subr.bf16.mxu0 0
    %626 = vmatpush1.bf16.msra.mxu0 0
    %627 = vmatprep.subr.bf16.mxu0 0
    %628 = vmatpush1.bf16.msra.mxu0 0
    %629 = vmatprep.subr.bf16.mxu0 0
    %630 = vmatpush1.bf16.msra.mxu0 0
    %631 = vmatprep.subr.bf16.mxu0 0
    %632 = vmatpush1.bf16.msra.mxu0 0
    %633 = vmatprep.mubr.bf16.mxu0 0
    %634 = vmatmul.mubr.bf16.gmra.mrb[0].mxu0 %v596
    %v635 = vpop.f32.mrb[0].mxu0
    %v636 = vadd.f32 0.0, %v635
    %v637 = vpop.f32.mrb[0].mxu0
    %v638 = vpop.f32.mrb[0].mxu0
    %v639 = vpop.f32.mrb[0].mxu0
    %640 = vdwg.mxu0
    %641 = vrot.lane.b32.xlu0 %v239, 64
    %v642 = vpop.permute.xlu0 %641
    %v644 = vsel %vm447, %v495, 0
    %v647 = vsel %vm501, %v642, 0
    %649 = vmatprep.subr.bf16.mxu0 0
    %650 = vmatpush1.bf16.msra.mxu0 %v647
    %651 = vmatprep.subr.bf16.mxu0 0
    %652 = vmatpush1.bf16.msra.mxu0 0
    %653 = vmatprep.subr.bf16.mxu0 0
    %654 = vmatpush1.bf16.msra.mxu0 0
    %655 = vmatprep.subr.bf16.mxu0 0
    %656 = vmatpush1.bf16.msra.mxu0 0
    %657 = vmatprep.subr.bf16.mxu0 0
    %658 = vmatpush1.bf16.msra.mxu0 0
    %659 = vmatprep.subr.bf16.mxu0 0
    %660 = vmatpush1.bf16.msra.mxu0 0
    %661 = vmatprep.subr.bf16.mxu0 0
    %662 = vmatpush1.bf16.msra.mxu0 0
    %663 = vmatprep.subr.bf16.mxu0 0
    %664 = vmatpush1.bf16.msra.mxu0 0
    %665 = vmatprep.subr.bf16.mxu0 0
    %666 = vmatpush1.bf16.msra.mxu0 0
    %667 = vmatprep.subr.bf16.mxu0 0
    %668 = vmatpush1.bf16.msra.mxu0 0
    %669 = vmatprep.subr.bf16.mxu0 0
    %670 = vmatpush1.bf16.msra.mxu0 0
    %671 = vmatprep.subr.bf16.mxu0 0
    %672 = vmatpush1.bf16.msra.mxu0 0
    %673 = vmatprep.subr.bf16.mxu0 0
    %674 = vmatpush1.bf16.msra.mxu0 0
    %675 = vmatprep.subr.bf16.mxu0 0
    %676 = vmatpush1.bf16.msra.mxu0 0
    %677 = vmatprep.subr.bf16.mxu0 0
    %678 = vmatpush1.bf16.msra.mxu0 0
    %679 = vmatprep.subr.bf16.mxu0 0
    %680 = vmatpush1.bf16.msra.mxu0 0
    %681 = vmatprep.mubr.bf16.mxu0 0
    %682 = vmatmul.mubr.bf16.gmra.mrb[0].mxu0 %v644
    %v683 = vpop.f32.mrb[0].mxu0
    %v684 = vadd.f32 0.0, %v683
    %v685 = vpop.f32.mrb[0].mxu0
    %v686 = vpop.f32.mrb[0].mxu0
    %v687 = vpop.f32.mrb[0].mxu0
    %688 = vdwg.mxu0
    %691 = vrot.lane.b32.xlu0 %v636, 16
    %v692 = vpop.permute.xlu0 %691
    %693 = vrot.lane.b32.xlu0 %v684, 16
    %v694 = vpop.permute.xlu0 %693
    %v697 = vsel %vm243, %v540, %v692
    %v698 = vsel %vm243, %v588, %v694
    %v699 = vpack.c.bf16 %v698, %v697
    %v700 = vld [vmem:[%s6] sm:$0xf]
    %v701 = vld [vmem:[%s6 + $0x4] sm:$0xf]
    %v702 = vld [vmem:[%s6 + $0x8] sm:$0xf]
    %v703 = vld [vmem:[%s6 + $0xc] sm:$0xf]
    %v704 = vlaneseq
    %v705 = vshrl.u32 %v704, 7
    %v706 = vsub.s32 0, %v705
    %v707 = vrot.slane %v121, %v706
    %v712 = vunpack.c.l.b16 %v700
    %v713 = vunpack.c.l.b16 %v701
    %v714 = vunpack.c.l.b16 %v702
    %v715 = vunpack.c.l.b16 %v703
    %v716 = vpack.c.b16 %v713, %v712
    %v717 = vpack.c.b16 %v715, %v714
    %v721 = vsel %vm63, %v699, 0
    %723 = vmatprep.subr.bf16.mxu0 0
    %724 = vmatpush1.bf16.msra.mxu0 %v716
    %725 = vmatprep.subr.bf16.mxu0 0
    %726 = vmatpush1.bf16.msra.mxu0 %v717
    %727 = vmatprep.subr.bf16.mxu0 0
    %728 = vmatpush1.bf16.msra.mxu0 0
    %729 = vmatprep.subr.bf16.mxu0 0
    %730 = vmatpush1.bf16.msra.mxu0 0
    %731 = vmatprep.subr.bf16.mxu0 0
    %732 = vmatpush1.bf16.msra.mxu0 0
    %733 = vmatprep.subr.bf16.mxu0 0
    %734 = vmatpush1.bf16.msra.mxu0 0
    %735 = vmatprep.subr.bf16.mxu0 0
    %736 = vmatpush1.bf16.msra.mxu0 0
    %737 = vmatprep.subr.bf16.mxu0 0
    %738 = vmatpush1.bf16.msra.mxu0 0
    %739 = vmatprep.subr.bf16.mxu0 0
    %740 = vmatpush1.bf16.msra.mxu0 0
    %741 = vmatprep.subr.bf16.mxu0 0
    %742 = vmatpush1.bf16.msra.mxu0 0
    %743 = vmatprep.subr.bf16.mxu0 0
    %744 = vmatpush1.bf16.msra.mxu0 0
    %745 = vmatprep.subr.bf16.mxu0 0
    %746 = vmatpush1.bf16.msra.mxu0 0
    %747 = vmatprep.subr.bf16.mxu0 0
    %748 = vmatpush1.bf16.msra.mxu0 0
    %749 = vmatprep.subr.bf16.mxu0 0
    %750 = vmatpush1.bf16.msra.mxu0 0
    %751 = vmatprep.subr.bf16.mxu0 0
    %752 = vmatpush1.bf16.msra.mxu0 0
    %753 = vmatprep.subr.bf16.mxu0 0
    %754 = vmatpush1.bf16.msra.mxu0 0
    %755 = vmatprep.mubr.bf16.mxu0 0
    %756 = vmatmul.mubr.bf16.gmra.mrb[0].mxu0 %v721
    %v757 = vpop.f32.mrb[0].mxu0
    %v758 = vadd.f32 %v707, %v757
    %v759 = vpop.f32.mrb[0].mxu0
    %v760 = vpop.f32.mrb[0].mxu0
    %v761 = vadd.f32 %v707, %v760
    %v762 = vpop.f32.mrb[0].mxu0
    %763 = vdwg.mxu0
    %v764 = vadd.f32 %v109, %v758
    %v765 = vadd.f32 %v110, %v761
    %v766 = vsel %vm63, %v764, 0.0
    %767 = vadd.xlane.f32.xlu0 %v766
    %v768 = vpop.xlane.xlu0 %767
    %v769 = vsel %vm63, %v765, 0.0
    %770 = vadd.xlane.f32.xlu0 %v769
    %v771 = vpop.xlane.xlu0 %770
    %v772 = vmul.f32 %v768, %v130
    %v773 = vmul.f32 %v771, %v130
    %v774 = vsub.f32 %v764, %v772
    %v775 = vsub.f32 %v765, %v773
    %v776 = vmul.f32 %v774, %v774
    %v777 = vmul.f32 %v775, %v775
    %v778 = vsel %vm63, %v776, 0.0
    %779 = vadd.xlane.f32.xlu0 %v778
    %v780 = vpop.xlane.xlu0 %779
    %v781 = vsel %vm63, %v777, 0.0
    %782 = vadd.xlane.f32.xlu0 %v781
    %v783 = vpop.xlane.xlu0 %782
    %v784 = vmul.f32 %v780, %v130
    %v785 = vmul.f32 %v783, %v130
    %v786 = vadd.f32 %v784, 1e-05
    %v787 = vadd.f32 %v785, 1e-05
    %v788 = vrsqrt.pop %v786
    %v789 = vrsqrt.pop %v787
    %v790 = vmul.f32 %v774, %v788
    %v791 = vmul.f32 %v775, %v789
    %v792 = vlaneseq
    %v793 = vshrl.u32 %v792, 7
    %v794 = vsub.s32 0, %v793
    %v795 = vrot.slane %v118, %v794
    %v796 = vmul.f32 %v790, %v795
    %v797 = vmul.f32 %v791, %v795
    %v798 = vlaneseq
    %v799 = vshrl.u32 %v798, 7
    %v800 = vsub.s32 0, %v799
    %v801 = vrot.slane %v119, %v800
    %v802 = vadd.f32 %v796, %v801
    %v803 = vadd.f32 %v797, %v801
    %v804 = vpack.c.bf16 %v803, %v802
    %v805 = vld [vmem:[%s8] sm:$0xf]
    %v806 = vld [vmem:[%s8 + $0x4] sm:$0xf]
    %v807 = vld [vmem:[%s8 + $0x8] sm:$0xf]
    %v808 = vld [vmem:[%s8 + $0xc] sm:$0xf]
    %v809 = vlaneseq
    %v810 = vshrl.u32 %v809, 7
    %v811 = vsub.s32 0, %v810
    %v812 = vrot.slane %v122, %v811
    %v817 = vunpack.c.l.b16 %v805
    %v818 = vunpack.c.l.b16 %v806
    %v819 = vunpack.c.l.b16 %v807
    %v820 = vunpack.c.l.b16 %v808
    %v821 = vpack.c.b16 %v818, %v817
    %v822 = vpack.c.b16 %v820, %v819
    %v826 = vsel %vm63, %v804, 0
    %828 = vmatprep.subr.bf16.mxu0 0
    %829 = vmatpush1.bf16.msra.mxu0 %v821
    %830 = vmatprep.subr.bf16.mxu0 0
    %831 = vmatpush1.bf16.msra.mxu0 %v822
    %832 = vmatprep.subr.bf16.mxu0 0
    %833 = vmatpush1.bf16.msra.mxu0 0
    %834 = vmatprep.subr.bf16.mxu0 0
    %835 = vmatpush1.bf16.msra.mxu0 0
    %836 = vmatprep.subr.bf16.mxu0 0
    %837 = vmatpush1.bf16.msra.mxu0 0
    %838 = vmatprep.subr.bf16.mxu0 0
    %839 = vmatpush1.bf16.msra.mxu0 0
    %840 = vmatprep.subr.bf16.mxu0 0
    %841 = vmatpush1.bf16.msra.mxu0 0
    %842 = vmatprep.subr.bf16.mxu0 0
    %843 = vmatpush1.bf16.msra.mxu0 0
    %844 = vmatprep.subr.bf16.mxu0 0
    %845 = vmatpush1.bf16.msra.mxu0 0
    %846 = vmatprep.subr.bf16.mxu0 0
    %847 = vmatpush1.bf16.msra.mxu0 0
    %848 = vmatprep.subr.bf16.mxu0 0
    %849 = vmatpush1.bf16.msra.mxu0 0
    %850 = vmatprep.subr.bf16.mxu0 0
    %851 = vmatpush1.bf16.msra.mxu0 0
    %852 = vmatprep.subr.bf16.mxu0 0
    %853 = vmatpush1.bf16.msra.mxu0 0
    %854 = vmatprep.subr.bf16.mxu0 0
    %855 = vmatpush1.bf16.msra.mxu0 0
    %856 = vmatprep.subr.bf16.mxu0 0
    %857 = vmatpush1.bf16.msra.mxu0 0
    %858 = vmatprep.subr.bf16.mxu0 0
    %859 = vmatpush1.bf16.msra.mxu0 0
    %860 = vmatprep.mubr.bf16.mxu0 0
    %861 = vmatmul.mubr.bf16.gmra.mrb[0].mxu0 %v826
    %v862 = vpop.f32.mrb[0].mxu0
    %v863 = vadd.f32 %v812, %v862
    %v864 = vpop.f32.mrb[0].mxu0
    %v865 = vpop.f32.mrb[0].mxu0
    %v866 = vadd.f32 %v812, %v865
    %v867 = vpop.f32.mrb[0].mxu0
    %868 = vdwg.mxu0
    %v869 = vmul.f32 %v863, 0.5
    %v870 = vmul.f32 %v866, 0.5
    %v871 = vmul.f32 %v863, %v863
    %v872 = vmul.f32 %v866, %v866
    %v873 = vmul.f32 %v871, %v863
    %v874 = vmul.f32 %v872, %v866
    %v875 = vmul.f32 %v873, 0.044715
    %v876 = vmul.f32 %v874, 0.044715
    %v877 = vadd.f32 %v863, %v875
    %v878 = vadd.f32 %v866, %v876
    %v879 = vmul.f32 %v877, 0.7978846
    %v880 = vmul.f32 %v878, 0.7978846
    %v881 = vtanh.pop %v879
    %v882 = vtanh.pop %v880
    %v883 = vadd.f32 %v881, 1.0
    %v884 = vadd.f32 %v882, 1.0
    %v885 = vmul.f32 %v869, %v883
    %v886 = vmul.f32 %v870, %v884
    %v887 = vpack.c.bf16 %v886, %v885
    %v888 = vld [vmem:[%s9] sm:$0xf]
    %v889 = vld [vmem:[%s9 + $0x4] sm:$0xf]
    %v890 = vld [vmem:[%s9 + $0x8] sm:$0xf]
    %v891 = vld [vmem:[%s9 + $0xc] sm:$0xf]
    %v892 = vld [vmem:[%s9 + $0x10] sm:$0xf]
    %v893 = vld [vmem:[%s9 + $0x14] sm:$0xf]
    %v894 = vld [vmem:[%s9 + $0x18] sm:$0xf]
    %v895 = vld [vmem:[%s9 + $0x1c] sm:$0xf]
    %v896 = vld [vmem:[%s9 + $0x20] sm:$0xf]
    %v897 = vld [vmem:[%s9 + $0x24] sm:$0xf]
    %v898 = vld [vmem:[%s9 + $0x28] sm:$0xf]
    %v899 = vld [vmem:[%s9 + $0x2c] sm:$0xf]
    %v900 = vld [vmem:[%s9 + $0x30] sm:$0xf]
    %v901 = vld [vmem:[%s9 + $0x34] sm:$0xf]
    %v902 = vld [vmem:[%s9 + $0x38] sm:$0xf]
    %v903 = vld [vmem:[%s9 + $0x3c] sm:$0xf]
    %v920 = vunpack.c.l.b16 %v888
    %v921 = vunpack.c.l.b16 %v889
    %v922 = vunpack.c.l.b16 %v890
    %v923 = vunpack.c.l.b16 %v891
    %v924 = vunpack.c.l.b16 %v892
    %v925 = vunpack.c.l.b16 %v893
    %v926 = vunpack.c.l.b16 %v894
    %v927 = vunpack.c.l.b16 %v895
    %v928 = vunpack.c.l.b16 %v896
    %v929 = vunpack.c.l.b16 %v897
    %v930 = vunpack.c.l.b16 %v898
    %v931 = vunpack.c.l.b16 %v899
    %v932 = vunpack.c.l.b16 %v900
    %v933 = vunpack.c.l.b16 %v901
    %v934 = vunpack.c.l.b16 %v902
    %v935 = vunpack.c.l.b16 %v903
    %v936 = vpack.c.b16 %v921, %v920
    %v937 = vpack.c.b16 %v923, %v922
    %v938 = vpack.c.b16 %v925, %v924
    %v939 = vpack.c.b16 %v927, %v926
    %v940 = vpack.c.b16 %v929, %v928
    %v941 = vpack.c.b16 %v931, %v930
    %v942 = vpack.c.b16 %v933, %v932
    %v943 = vpack.c.b16 %v935, %v934
    %952 = vmatprep.subr.bf16.mxu0 0
    %953 = vmatpush1.bf16.msra.mxu0 %v936
    %954 = vmatprep.subr.bf16.mxu0 0
    %955 = vmatpush1.bf16.msra.mxu0 %v937
    %956 = vmatprep.subr.bf16.mxu0 0
    %957 = vmatpush1.bf16.msra.mxu0 %v938
    %958 = vmatprep.subr.bf16.mxu0 0
    %959 = vmatpush1.bf16.msra.mxu0 %v939
    %960 = vmatprep.subr.bf16.mxu0 0
    %961 = vmatpush1.bf16.msra.mxu0 %v940
    %962 = vmatprep.subr.bf16.mxu0 0
    %963 = vmatpush1.bf16.msra.mxu0 %v941
    %964 = vmatprep.subr.bf16.mxu0 0
    %965 = vmatpush1.bf16.msra.mxu0 %v942
    %966 = vmatprep.subr.bf16.mxu0 0
    %967 = vmatpush1.bf16.msra.mxu0 %v943
    %968 = vmatprep.subr.bf16.mxu0 0
    %969 = vmatpush1.bf16.msra.mxu0 0
    %970 = vmatprep.subr.bf16.mxu0 0
    %971 = vmatpush1.bf16.msra.mxu0 0
    %972 = vmatprep.subr.bf16.mxu0 0
    %973 = vmatpush1.bf16.msra.mxu0 0
    %974 = vmatprep.subr.bf16.mxu0 0
    %975 = vmatpush1.bf16.msra.mxu0 0
    %976 = vmatprep.subr.bf16.mxu0 0
    %977 = vmatpush1.bf16.msra.mxu0 0
    %978 = vmatprep.subr.bf16.mxu0 0
    %979 = vmatpush1.bf16.msra.mxu0 0
    %980 = vmatprep.subr.bf16.mxu0 0
    %981 = vmatpush1.bf16.msra.mxu0 0
    %982 = vmatprep.subr.bf16.mxu0 0
    %983 = vmatpush1.bf16.msra.mxu0 0
    %984 = vmatprep.mubr.bf16.mxu0 0
    %985 = vmatmul.mubr.bf16.gmra.mrb[0].mxu0 %v887
    %v986 = vpop.f32.mrb[0].mxu0
    %v987 = vadd.f32 0.0, %v986
    %v988 = vpop.f32.mrb[0].mxu0
    %v989 = vpop.f32.mrb[0].mxu0
    %v990 = vadd.f32 0.0, %v989
    %v991 = vpop.f32.mrb[0].mxu0
    %992 = vdwg.mxu0
    %v993 = vadd.f32 %v764, %v987
    %v994 = vadd.f32 %v765, %v990
    %v995 = vlaneseq
    %v996 = vshrl.u32 %v995, 7
    %v997 = vsub.s32 0, %v996
    %v998 = vrot.slane %v123, %v997
    %v999 = vadd.f32 %v993, %v998
    %v1000 = vadd.f32 %v994, %v998
    %s1001 = scalar_lea.vmem %s4, 4
    %v1002 = vld [vmem:[%s1001] sm:$0x1]
    %v1003 = vld [vmem:[%s1001 + $0x1] sm:$0x1]
    %v1004 = vld [vmem:[%s1001 + $0x2] sm:$0x1]
    %v1005 = vld [vmem:[%s1001 + $0x3] sm:$0x1]
    %s1006 = scalar_lea.vmem %s7, 4
    %v1007 = vld [vmem:[%s1006] sm:$0x1]
    %v1008 = vld [vmem:[%s1006 + $0x1] sm:$0x1]
    %v1009 = vld [vmem:[%s1006 + $0x2] sm:$0x1]
    %v1010 = vld [vmem:[%s1006 + $0x3] sm:$0x1]
    %v1011 = vsel %vm63, %v999, 0.0
    %1012 = vadd.xlane.f32.xlu0 %v1011
    %v1013 = vpop.xlane.xlu0 %1012
    %v1014 = vsel %vm63, %v1000, 0.0
    %1015 = vadd.xlane.f32.xlu0 %v1014
    %v1016 = vpop.xlane.xlu0 %1015
    %v1017 = vmul.f32 %v1013, %v130
    %v1018 = vmul.f32 %v1016, %v130
    %v1019 = vsub.f32 %v999, %v1017
    %v1020 = vsub.f32 %v1000, %v1018
    %v1021 = vmul.f32 %v1019, %v1019
    %v1022 = vmul.f32 %v1020, %v1020
    %v1023 = vsel %vm63, %v1021, 0.0
    %1024 = vadd.xlane.f32.xlu0 %v1023
    %v1025 = vpop.xlane.xlu0 %1024
    %v1026 = vsel %vm63, %v1022, 0.0
    %1027 = vadd.xlane.f32.xlu0 %v1026
    %v1028 = vpop.xlane.xlu0 %1027
    %v1029 = vmul.f32 %v1025, %v130
    %v1030 = vmul.f32 %v1028, %v130
    %v1031 = vadd.f32 %v1029, 1e-05
    %v1032 = vadd.f32 %v1030, 1e-05
    %v1033 = vrsqrt.pop %v1031
    %v1034 = vrsqrt.pop %v1032
    %v1035 = vmul.f32 %v1019, %v1033
    %v1036 = vmul.f32 %v1020, %v1034
    %v1037 = vlaneseq
    %v1038 = vshrl.u32 %v1037, 7
    %v1039 = vsub.s32 0, %v1038
    %v1040 = vrot.slane %v1002, %v1039
    %v1041 = vmul.f32 %v1035, %v1040
    %v1042 = vmul.f32 %v1036, %v1040
    %v1043 = vlaneseq
    %v1044 = vshrl.u32 %v1043, 7
    %v1045 = vsub.s32 0, %v1044
    %v1046 = vrot.slane %v1003, %v1045
    %v1047 = vadd.f32 %v1041, %v1046
    %v1048 = vadd.f32 %v1042, %v1046
    %v1049 = vpack.c.bf16 %v1048, %v1047
    %s1050 = scalar_lea.vmem %s5, 16
    %v1051 = vld [vmem:[%s1050] sm:$0xf]
    %v1052 = vld [vmem:[%s1050 + $0x4] sm:$0xf]
    %v1053 = vld [vmem:[%s1050 + $0x8] sm:$0xf]
    %v1054 = vld [vmem:[%s1050 + $0xc] sm:$0xf]
    %v1055 = vlaneseq
    %v1056 = vshrl.u32 %v1055, 7
    %v1057 = vsub.s32 0, %v1056
    %v1058 = vrot.slane %v1007, %v1057
    %v1063 = vunpack.c.l.b16 %v1051
    %v1064 = vunpack.c.l.b16 %v1052
    %v1065 = vunpack.c.l.b16 %v1053
    %v1066 = vunpack.c.l.b16 %v1054
    %v1067 = vpack.c.b16 %v1064, %v1063
    %v1068 = vpack.c.b16 %v1066, %v1065
    %v1072 = vsel %vm63, %v1049, 0
    %1074 = vmatprep.subr.bf16.mxu0 0
    %1075 = vmatpush1.bf16.msra.mxu0 %v1067
    %1076 = vmatprep.subr.bf16.mxu0 0
    %1077 = vmatpush1.bf16.msra.mxu0 %v1068
    %1078 = vmatprep.subr.bf16.mxu0 0
    %1079 = vmatpush1.bf16.msra.mxu0 0
    %1080 = vmatprep.subr.bf16.mxu0 0
    %1081 = vmatpush1.bf16.msra.mxu0 0
    %1082 = vmatprep.subr.bf16.mxu0 0
    %1083 = vmatpush1.bf16.msra.mxu0 0
    %1084 = vmatprep.subr.bf16.mxu0 0
    %1085 = vmatpush1.bf16.msra.mxu0 0
    %1086 = vmatprep.subr.bf16.mxu0 0
    %1087 = vmatpush1.bf16.msra.mxu0 0
    %1088 = vmatprep.subr.bf16.mxu0 0
    %1089 = vmatpush1.bf16.msra.mxu0 0
    %1090 = vmatprep.subr.bf16.mxu0 0
    %1091 = vmatpush1.bf16.msra.mxu0 0
    %1092 = vmatprep.subr.bf16.mxu0 0
    %1093 = vmatpush1.bf16.msra.mxu0 0
    %1094 = vmatprep.subr.bf16.mxu0 0
    %1095 = vmatpush1.bf16.msra.mxu0 0
    %1096 = vmatprep.subr.bf16.mxu0 0
    %1097 = vmatpush1.bf16.msra.mxu0 0
    %1098 = vmatprep.subr.bf16.mxu0 0
    %1099 = vmatpush1.bf16.msra.mxu0 0
    %1100 = vmatprep.subr.bf16.mxu0 0
    %1101 = vmatpush1.bf16.msra.mxu0 0
    %1102 = vmatprep.subr.bf16.mxu0 0
    %1103 = vmatpush1.bf16.msra.mxu0 0
    %1104 = vmatprep.subr.bf16.mxu0 0
    %1105 = vmatpush1.bf16.msra.mxu0 0
    %1106 = vmatprep.mubr.bf16.mxu0 0
    %1107 = vmatmul.mubr.bf16.gmra.mrb[0].mxu0 %v1072
    %v1108 = vpop.f32.mrb[0].mxu0
    %v1109 = vadd.f32 %v1058, %v1108
    %v1110 = vpop.f32.mrb[0].mxu0
    %v1111 = vpop.f32.mrb[0].mxu0
    %v1112 = vadd.f32 %v1058, %v1111
    %v1113 = vpop.f32.mrb[0].mxu0
    %1114 = vdwg.mxu0
    %1117 = vrot.lane.b32.xlu0 %v1109, 112
    %v1118 = vpop.permute.xlu0 %1117
    %1119 = vrot.lane.b32.xlu0 %v1112, 112
    %v1120 = vpop.permute.xlu0 %1119
    %v1123 = vpack.c.bf16 %v1109, %v1109
    %v1124 = vpack.c.bf16 %v1112, %v1112
    %v1125 = vpack.c.bf16 %v1118, %v1118
    %v1126 = vpack.c.bf16 %v1120, %v1120
    %1128 = vrot.lane.b32.xlu0 %v1123, 96
    %v1129 = vpop.permute.xlu0 %1128
    %v1131 = vsel %vm243, %v1123, 0
    %v1134 = vsel %vm243, %v1129, 0
    %1136 = vmatprep.subr.bf16.mxu0 0
    %1137 = vmatpush1.bf16.xpose.msra.mxu0 %v1134
    %1138 = vmatprep.subr.bf16.mxu0 0
    %1139 = vmatpush1.bf16.xpose.msra.mxu0 0
    %1140 = vmatprep.subr.bf16.mxu0 0
    %1141 = vmatpush1.bf16.xpose.msra.mxu0 0
    %1142 = vmatprep.subr.bf16.mxu0 0
    %1143 = vmatpush1.bf16.xpose.msra.mxu0 0
    %1144 = vmatprep.subr.bf16.mxu0 0
    %1145 = vmatpush1.bf16.xpose.msra.mxu0 0
    %1146 = vmatprep.subr.bf16.mxu0 0
    %1147 = vmatpush1.bf16.xpose.msra.mxu0 0
    %1148 = vmatprep.subr.bf16.mxu0 0
    %1149 = vmatpush1.bf16.xpose.msra.mxu0 0
    %1150 = vmatprep.subr.bf16.mxu0 0
    %1151 = vmatpush1.bf16.xpose.msra.mxu0 0
    %1152 = vmatprep.subr.bf16.mxu0 0
    %1153 = vmatpush1.bf16.xpose.msra.mxu0 0
    %1154 = vmatprep.subr.bf16.mxu0 0
    %1155 = vmatpush1.bf16.xpose.msra.mxu0 0
    %1156 = vmatprep.subr.bf16.mxu0 0
    %1157 = vmatpush1.bf16.xpose.msra.mxu0 0
    %1158 = vmatprep.subr.bf16.mxu0 0
    %1159 = vmatpush1.bf16.xpose.msra.mxu0 0
    %1160 = vmatprep.subr.bf16.mxu0 0
    %1161 = vmatpush1.bf16.xpose.msra.mxu0 0
    %1162 = vmatprep.subr.bf16.mxu0 0
    %1163 = vmatpush1.bf16.xpose.msra.mxu0 0
    %1164 = vmatprep.subr.bf16.mxu0 0
    %1165 = vmatpush1.bf16.xpose.msra.mxu0 0
    %1166 = vmatprep.subr.bf16.mxu0 0
    %1167 = vmatpush1.bf16.xpose.msra.mxu0 0
    %1168 = vmatprep.mubr.bf16.mxu0 0
    %1169 = vmatmul.mubr.bf16.gmra.mrb[0].mxu0 %v1131
    %v1170 = vpop.f32.mrb[0].mxu0
    %v1171 = vadd.f32 0.0, %v1170
    %v1172 = vpop.f32.mrb[0].mxu0
    %v1173 = vpop.f32.mrb[0].mxu0
    %v1174 = vpop.f32.mrb[0].mxu0
    %1175 = vdwg.mxu0
    %1177 = vrot.lane.b32.xlu0 %v1124, 96
    %v1178 = vpop.permute.xlu0 %1177
    %v1180 = vsel %vm243, %v1124, 0
    %v1183 = vsel %vm243, %v1178, 0
    %1185 = vmatprep.subr.bf16.mxu0 0
    %1186 = vmatpush1.bf16.xpose.msra.mxu0 %v1183
    %1187 = vmatprep.subr.bf16.mxu0 0
    %1188 = vmatpush1.bf16.xpose.msra.mxu0 0
    %1189 = vmatprep.subr.bf16.mxu0 0
    %1190 = vmatpush1.bf16.xpose.msra.mxu0 0
    %1191 = vmatprep.subr.bf16.mxu0 0
    %1192 = vmatpush1.bf16.xpose.msra.mxu0 0
    %1193 = vmatprep.subr.bf16.mxu0 0
    %1194 = vmatpush1.bf16.xpose.msra.mxu0 0
    %1195 = vmatprep.subr.bf16.mxu0 0
    %1196 = vmatpush1.bf16.xpose.msra.mxu0 0
    %1197 = vmatprep.subr.bf16.mxu0 0
    %1198 = vmatpush1.bf16.xpose.msra.mxu0 0
    %1199 = vmatprep.subr.bf16.mxu0 0
    %1200 = vmatpush1.bf16.xpose.msra.mxu0 0
    %1201 = vmatprep.subr.bf16.mxu0 0
    %1202 = vmatpush1.bf16.xpose.msra.mxu0 0
    %1203 = vmatprep.subr.bf16.mxu0 0
    %1204 = vmatpush1.bf16.xpose.msra.mxu0 0
    %1205 = vmatprep.subr.bf16.mxu0 0
    %1206 = vmatpush1.bf16.xpose.msra.mxu0 0
    %1207 = vmatprep.subr.bf16.mxu0 0
    %1208 = vmatpush1.bf16.xpose.msra.mxu0 0
    %1209 = vmatprep.subr.bf16.mxu0 0
    %1210 = vmatpush1.bf16.xpose.msra.mxu0 0
    %1211 = vmatprep.subr.bf16.mxu0 0
    %1212 = vmatpush1.bf16.xpose.msra.mxu0 0
    %1213 = vmatprep.subr.bf16.mxu0 0
    %1214 = vmatpush1.bf16.xpose.msra.mxu0 0
    %1215 = vmatprep.subr.bf16.mxu0 0
    %1216 = vmatpush1.bf16.xpose.msra.mxu0 0
    %1217 = vmatprep.mubr.bf16.mxu0 0
    %1218 = vmatmul.mubr.bf16.gmra.mrb[0].mxu0 %v1180
    %v1219 = vpop.f32.mrb[0].mxu0
    %v1220 = vadd.f32 0.0, %v1219
    %v1221 = vpop.f32.mrb[0].mxu0
    %v1222 = vpop.f32.mrb[0].mxu0
    %v1223 = vpop.f32.mrb[0].mxu0
    %1224 = vdwg.mxu0
    %1226 = vrot.lane.b32.xlu0 %v1125, 96
    %v1227 = vpop.permute.xlu0 %1226
    %v1229 = vsel %vm243, %v1125, 0
    %v1232 = vsel %vm243, %v1227, 0
    %1234 = vmatprep.subr.bf16.mxu0 0
    %1235 = vmatpush1.bf16.xpose.msra.mxu0 %v1232
    %1236 = vmatprep.subr.bf16.mxu0 0
    %1237 = vmatpush1.bf16.xpose.msra.mxu0 0
    %1238 = vmatprep.subr.bf16.mxu0 0
    %1239 = vmatpush1.bf16.xpose.msra.mxu0 0
    %1240 = vmatprep.subr.bf16.mxu0 0
    %1241 = vmatpush1.bf16.xpose.msra.mxu0 0
    %1242 = vmatprep.subr.bf16.mxu0 0
    %1243 = vmatpush1.bf16.xpose.msra.mxu0 0
    %1244 = vmatprep.subr.bf16.mxu0 0
    %1245 = vmatpush1.bf16.xpose.msra.mxu0 0
    %1246 = vmatprep.subr.bf16.mxu0 0
    %1247 = vmatpush1.bf16.xpose.msra.mxu0 0
    %1248 = vmatprep.subr.bf16.mxu0 0
    %1249 = vmatpush1.bf16.xpose.msra.mxu0 0
    %1250 = vmatprep.subr.bf16.mxu0 0
    %1251 = vmatpush1.bf16.xpose.msra.mxu0 0
    %1252 = vmatprep.subr.bf16.mxu0 0
    %1253 = vmatpush1.bf16.xpose.msra.mxu0 0
    %1254 = vmatprep.subr.bf16.mxu0 0
    %1255 = vmatpush1.bf16.xpose.msra.mxu0 0
    %1256 = vmatprep.subr.bf16.mxu0 0
    %1257 = vmatpush1.bf16.xpose.msra.mxu0 0
    %1258 = vmatprep.subr.bf16.mxu0 0
    %1259 = vmatpush1.bf16.xpose.msra.mxu0 0
    %1260 = vmatprep.subr.bf16.mxu0 0
    %1261 = vmatpush1.bf16.xpose.msra.mxu0 0
    %1262 = vmatprep.subr.bf16.mxu0 0
    %1263 = vmatpush1.bf16.xpose.msra.mxu0 0
    %1264 = vmatprep.subr.bf16.mxu0 0
    %1265 = vmatpush1.bf16.xpose.msra.mxu0 0
    %1266 = vmatprep.mubr.bf16.mxu0 0
    %1267 = vmatmul.mubr.bf16.gmra.mrb[0].mxu0 %v1229
    %v1268 = vpop.f32.mrb[0].mxu0
    %v1269 = vadd.f32 0.0, %v1268
    %v1270 = vpop.f32.mrb[0].mxu0
    %v1271 = vpop.f32.mrb[0].mxu0
    %v1272 = vpop.f32.mrb[0].mxu0
    %1273 = vdwg.mxu0
    %1275 = vrot.lane.b32.xlu0 %v1126, 96
    %v1276 = vpop.permute.xlu0 %1275
    %v1278 = vsel %vm243, %v1126, 0
    %v1281 = vsel %vm243, %v1276, 0
    %1283 = vmatprep.subr.bf16.mxu0 0
    %1284 = vmatpush1.bf16.xpose.msra.mxu0 %v1281
    %1285 = vmatprep.subr.bf16.mxu0 0
    %1286 = vmatpush1.bf16.xpose.msra.mxu0 0
    %1287 = vmatprep.subr.bf16.mxu0 0
    %1288 = vmatpush1.bf16.xpose.msra.mxu0 0
    %1289 = vmatprep.subr.bf16.mxu0 0
    %1290 = vmatpush1.bf16.xpose.msra.mxu0 0
    %1291 = vmatprep.subr.bf16.mxu0 0
    %1292 = vmatpush1.bf16.xpose.msra.mxu0 0
    %1293 = vmatprep.subr.bf16.mxu0 0
    %1294 = vmatpush1.bf16.xpose.msra.mxu0 0
    %1295 = vmatprep.subr.bf16.mxu0 0
    %1296 = vmatpush1.bf16.xpose.msra.mxu0 0
    %1297 = vmatprep.subr.bf16.mxu0 0
    %1298 = vmatpush1.bf16.xpose.msra.mxu0 0
    %1299 = vmatprep.subr.bf16.mxu0 0
    %1300 = vmatpush1.bf16.xpose.msra.mxu0 0
    %1301 = vmatprep.subr.bf16.mxu0 0
    %1302 = vmatpush1.bf16.xpose.msra.mxu0 0
    %1303 = vmatprep.subr.bf16.mxu0 0
    %1304 = vmatpush1.bf16.xpose.msra.mxu0 0
    %1305 = vmatprep.subr.bf16.mxu0 0
    %1306 = vmatpush1.bf16.xpose.msra.mxu0 0
    %1307 = vmatprep.subr.bf16.mxu0 0
    %1308 = vmatpush1.bf16.xpose.msra.mxu0 0
    %1309 = vmatprep.subr.bf16.mxu0 0
    %1310 = vmatpush1.bf16.xpose.msra.mxu0 0
    %1311 = vmatprep.subr.bf16.mxu0 0
    %1312 = vmatpush1.bf16.xpose.msra.mxu0 0
    %1313 = vmatprep.subr.bf16.mxu0 0
    %1314 = vmatpush1.bf16.xpose.msra.mxu0 0
    %1315 = vmatprep.mubr.bf16.mxu0 0
    %1316 = vmatmul.mubr.bf16.gmra.mrb[0].mxu0 %v1278
    %v1317 = vpop.f32.mrb[0].mxu0
    %v1318 = vadd.f32 0.0, %v1317
    %v1319 = vpop.f32.mrb[0].mxu0
    %v1320 = vpop.f32.mrb[0].mxu0
    %v1321 = vpop.f32.mrb[0].mxu0
    %1322 = vdwg.mxu0
    %v1323 = vmul.f32 %v1171, 0.25
    %v1324 = vmul.f32 %v1220, 0.25
    %v1325 = vmul.f32 %v1269, 0.25
    %v1326 = vmul.f32 %v1318, 0.25
    %v1327 = vsel %vm442, %v1323, -1e+30
    %v1328 = vsel %vm442, %v1324, -1e+30
    %v1329 = vsel %vm442, %v1325, -1e+30
    %v1330 = vsel %vm442, %v1326, -1e+30
    %v1331 = vsel %vm447, %v1327, -inf
    %1332 = vmax.xlane.f32.xlu0 %v1331
    %v1333 = vpop.xlane.xlu0 %1332
    %v1334 = vsel %vm447, %v1328, -inf
    %1335 = vmax.xlane.f32.xlu0 %v1334
    %v1336 = vpop.xlane.xlu0 %1335
    %v1337 = vsel %vm447, %v1329, -inf
    %1338 = vmax.xlane.f32.xlu0 %v1337
    %v1339 = vpop.xlane.xlu0 %1338
    %v1340 = vsel %vm447, %v1330, -inf
    %1341 = vmax.xlane.f32.xlu0 %v1340
    %v1342 = vpop.xlane.xlu0 %1341
    %v1343 = vsub.f32 %v1327, %v1333
    %v1344 = vsub.f32 %v1328, %v1336
    %v1345 = vsub.f32 %v1329, %v1339
    %v1346 = vsub.f32 %v1330, %v1342
    %v1347 = vmul.f32 %v1343, 1.442695
    %v1348 = vpow.pop %v1347
    %v1349 = vmul.f32 %v1344, 1.442695
    %v1350 = vpow.pop %v1349
    %v1351 = vmul.f32 %v1345, 1.442695
    %v1352 = vpow.pop %v1351
    %v1353 = vmul.f32 %v1346, 1.442695
    %v1354 = vpow.pop %v1353
    %v1355 = vsel %vm447, %v1348, 0.0
    %1356 = vadd.xlane.f32.xlu0 %v1355
    %v1357 = vpop.xlane.xlu0 %1356
    %v1358 = vsel %vm447, %v1350, 0.0
    %1359 = vadd.xlane.f32.xlu0 %v1358
    %v1360 = vpop.xlane.xlu0 %1359
    %v1361 = vsel %vm447, %v1352, 0.0
    %1362 = vadd.xlane.f32.xlu0 %v1361
    %v1363 = vpop.xlane.xlu0 %1362
    %v1364 = vsel %vm447, %v1354, 0.0
    %1365 = vadd.xlane.f32.xlu0 %v1364
    %v1366 = vpop.xlane.xlu0 %1365
    %v1367 = vrcp.pop %v1357
    %v1368 = vrcp.pop %v1360
    %v1369 = vrcp.pop %v1363
    %v1370 = vrcp.pop %v1366
    %v1371 = vmul.f32 %v1348, %v1367
    %v1372 = vmul.f32 %v1350, %v1368
    %v1373 = vmul.f32 %v1352, %v1369
    %v1374 = vmul.f32 %v1354, %v1370
    %v1375 = vpack.c.bf16 %v1371, %v1371
    %v1376 = vpack.c.bf16 %v1372, %v1372
    %v1377 = vpack.c.bf16 %v1373, %v1373
    %v1378 = vpack.c.bf16 %v1374, %v1374
    %1379 = vrot.lane.b32.xlu0 %v1123, 64
    %v1380 = vpop.permute.xlu0 %1379
    %v1382 = vsel %vm447, %v1375, 0
    %v1385 = vsel %vm501, %v1380, 0
    %1387 = vmatprep.subr.bf16.mxu0 0
    %1388 = vmatpush1.bf16.msra.mxu0 %v1385
    %1389 = vmatprep.subr.bf16.mxu0 0
    %1390 = vmatpush1.bf16.msra.mxu0 0
    %1391 = vmatprep.subr.bf16.mxu0 0
    %1392 = vmatpush1.bf16.msra.mxu0 0
    %1393 = vmatprep.subr.bf16.mxu0 0
    %1394 = vmatpush1.bf16.msra.mxu0 0
    %1395 = vmatprep.subr.bf16.mxu0 0
    %1396 = vmatpush1.bf16.msra.mxu0 0
    %1397 = vmatprep.subr.bf16.mxu0 0
    %1398 = vmatpush1.bf16.msra.mxu0 0
    %1399 = vmatprep.subr.bf16.mxu0 0
    %1400 = vmatpush1.bf16.msra.mxu0 0
    %1401 = vmatprep.subr.bf16.mxu0 0
    %1402 = vmatpush1.bf16.msra.mxu0 0
    %1403 = vmatprep.subr.bf16.mxu0 0
    %1404 = vmatpush1.bf16.msra.mxu0 0
    %1405 = vmatprep.subr.bf16.mxu0 0
    %1406 = vmatpush1.bf16.msra.mxu0 0
    %1407 = vmatprep.subr.bf16.mxu0 0
    %1408 = vmatpush1.bf16.msra.mxu0 0
    %1409 = vmatprep.subr.bf16.mxu0 0
    %1410 = vmatpush1.bf16.msra.mxu0 0
    %1411 = vmatprep.subr.bf16.mxu0 0
    %1412 = vmatpush1.bf16.msra.mxu0 0
    %1413 = vmatprep.subr.bf16.mxu0 0
    %1414 = vmatpush1.bf16.msra.mxu0 0
    %1415 = vmatprep.subr.bf16.mxu0 0
    %1416 = vmatpush1.bf16.msra.mxu0 0
    %1417 = vmatprep.subr.bf16.mxu0 0
    %1418 = vmatpush1.bf16.msra.mxu0 0
    %1419 = vmatprep.mubr.bf16.mxu0 0
    %1420 = vmatmul.mubr.bf16.gmra.mrb[0].mxu0 %v1382
    %v1421 = vpop.f32.mrb[0].mxu0
    %v1422 = vadd.f32 0.0, %v1421
    %v1423 = vpop.f32.mrb[0].mxu0
    %v1424 = vpop.f32.mrb[0].mxu0
    %v1425 = vpop.f32.mrb[0].mxu0
    %1426 = vdwg.mxu0
    %1427 = vrot.lane.b32.xlu0 %v1124, 64
    %v1428 = vpop.permute.xlu0 %1427
    %v1430 = vsel %vm447, %v1376, 0
    %v1433 = vsel %vm501, %v1428, 0
    %1435 = vmatprep.subr.bf16.mxu0 0
    %1436 = vmatpush1.bf16.msra.mxu0 %v1433
    %1437 = vmatprep.subr.bf16.mxu0 0
    %1438 = vmatpush1.bf16.msra.mxu0 0
    %1439 = vmatprep.subr.bf16.mxu0 0
    %1440 = vmatpush1.bf16.msra.mxu0 0
    %1441 = vmatprep.subr.bf16.mxu0 0
    %1442 = vmatpush1.bf16.msra.mxu0 0
    %1443 = vmatprep.subr.bf16.mxu0 0
    %1444 = vmatpush1.bf16.msra.mxu0 0
    %1445 = vmatprep.subr.bf16.mxu0 0
    %1446 = vmatpush1.bf16.msra.mxu0 0
    %1447 = vmatprep.subr.bf16.mxu0 0
    %1448 = vmatpush1.bf16.msra.mxu0 0
    %1449 = vmatprep.subr.bf16.mxu0 0
    %1450 = vmatpush1.bf16.msra.mxu0 0
    %1451 = vmatprep.subr.bf16.mxu0 0
    %1452 = vmatpush1.bf16.msra.mxu0 0
    %1453 = vmatprep.subr.bf16.mxu0 0
    %1454 = vmatpush1.bf16.msra.mxu0 0
    %1455 = vmatprep.subr.bf16.mxu0 0
    %1456 = vmatpush1.bf16.msra.mxu0 0
    %1457 = vmatprep.subr.bf16.mxu0 0
    %1458 = vmatpush1.bf16.msra.mxu0 0
    %1459 = vmatprep.subr.bf16.mxu0 0
    %1460 = vmatpush1.bf16.msra.mxu0 0
    %1461 = vmatprep.subr.bf16.mxu0 0
    %1462 = vmatpush1.bf16.msra.mxu0 0
    %1463 = vmatprep.subr.bf16.mxu0 0
    %1464 = vmatpush1.bf16.msra.mxu0 0
    %1465 = vmatprep.subr.bf16.mxu0 0
    %1466 = vmatpush1.bf16.msra.mxu0 0
    %1467 = vmatprep.mubr.bf16.mxu0 0
    %1468 = vmatmul.mubr.bf16.gmra.mrb[0].mxu0 %v1430
    %v1469 = vpop.f32.mrb[0].mxu0
    %v1470 = vadd.f32 0.0, %v1469
    %v1471 = vpop.f32.mrb[0].mxu0
    %v1472 = vpop.f32.mrb[0].mxu0
    %v1473 = vpop.f32.mrb[0].mxu0
    %1474 = vdwg.mxu0
    %1475 = vrot.lane.b32.xlu0 %v1125, 64
    %v1476 = vpop.permute.xlu0 %1475
    %v1478 = vsel %vm447, %v1377, 0
    %v1481 = vsel %vm501, %v1476, 0
    %1483 = vmatprep.subr.bf16.mxu0 0
    %1484 = vmatpush1.bf16.msra.mxu0 %v1481
    %1485 = vmatprep.subr.bf16.mxu0 0
    %1486 = vmatpush1.bf16.msra.mxu0 0
    %1487 = vmatprep.subr.bf16.mxu0 0
    %1488 = vmatpush1.bf16.msra.mxu0 0
    %1489 = vmatprep.subr.bf16.mxu0 0
    %1490 = vmatpush1.bf16.msra.mxu0 0
    %1491 = vmatprep.subr.bf16.mxu0 0
    %1492 = vmatpush1.bf16.msra.mxu0 0
    %1493 = vmatprep.subr.bf16.mxu0 0
    %1494 = vmatpush1.bf16.msra.mxu0 0
    %1495 = vmatprep.subr.bf16.mxu0 0
    %1496 = vmatpush1.bf16.msra.mxu0 0
    %1497 = vmatprep.subr.bf16.mxu0 0
    %1498 = vmatpush1.bf16.msra.mxu0 0
    %1499 = vmatprep.subr.bf16.mxu0 0
    %1500 = vmatpush1.bf16.msra.mxu0 0
    %1501 = vmatprep.subr.bf16.mxu0 0
    %1502 = vmatpush1.bf16.msra.mxu0 0
    %1503 = vmatprep.subr.bf16.mxu0 0
    %1504 = vmatpush1.bf16.msra.mxu0 0
    %1505 = vmatprep.subr.bf16.mxu0 0
    %1506 = vmatpush1.bf16.msra.mxu0 0
    %1507 = vmatprep.subr.bf16.mxu0 0
    %1508 = vmatpush1.bf16.msra.mxu0 0
    %1509 = vmatprep.subr.bf16.mxu0 0
    %1510 = vmatpush1.bf16.msra.mxu0 0
    %1511 = vmatprep.subr.bf16.mxu0 0
    %1512 = vmatpush1.bf16.msra.mxu0 0
    %1513 = vmatprep.subr.bf16.mxu0 0
    %1514 = vmatpush1.bf16.msra.mxu0 0
    %1515 = vmatprep.mubr.bf16.mxu0 0
    %1516 = vmatmul.mubr.bf16.gmra.mrb[0].mxu0 %v1478
    %v1517 = vpop.f32.mrb[0].mxu0
    %v1518 = vadd.f32 0.0, %v1517
    %v1519 = vpop.f32.mrb[0].mxu0
    %v1520 = vpop.f32.mrb[0].mxu0
    %v1521 = vpop.f32.mrb[0].mxu0
    %1522 = vdwg.mxu0
    %1523 = vrot.lane.b32.xlu0 %v1126, 64
    %v1524 = vpop.permute.xlu0 %1523
    %v1526 = vsel %vm447, %v1378, 0
    %v1529 = vsel %vm501, %v1524, 0
    %1531 = vmatprep.subr.bf16.mxu0 0
    %1532 = vmatpush1.bf16.msra.mxu0 %v1529
    %1533 = vmatprep.subr.bf16.mxu0 0
    %1534 = vmatpush1.bf16.msra.mxu0 0
    %1535 = vmatprep.subr.bf16.mxu0 0
    %1536 = vmatpush1.bf16.msra.mxu0 0
    %1537 = vmatprep.subr.bf16.mxu0 0
    %1538 = vmatpush1.bf16.msra.mxu0 0
    %1539 = vmatprep.subr.bf16.mxu0 0
    %1540 = vmatpush1.bf16.msra.mxu0 0
    %1541 = vmatprep.subr.bf16.mxu0 0
    %1542 = vmatpush1.bf16.msra.mxu0 0
    %1543 = vmatprep.subr.bf16.mxu0 0
    %1544 = vmatpush1.bf16.msra.mxu0 0
    %1545 = vmatprep.subr.bf16.mxu0 0
    %1546 = vmatpush1.bf16.msra.mxu0 0
    %1547 = vmatprep.subr.bf16.mxu0 0
    %1548 = vmatpush1.bf16.msra.mxu0 0
    %1549 = vmatprep.subr.bf16.mxu0 0
    %1550 = vmatpush1.bf16.msra.mxu0 0
    %1551 = vmatprep.subr.bf16.mxu0 0
    %1552 = vmatpush1.bf16.msra.mxu0 0
    %1553 = vmatprep.subr.bf16.mxu0 0
    %1554 = vmatpush1.bf16.msra.mxu0 0
    %1555 = vmatprep.subr.bf16.mxu0 0
    %1556 = vmatpush1.bf16.msra.mxu0 0
    %1557 = vmatprep.subr.bf16.mxu0 0
    %1558 = vmatpush1.bf16.msra.mxu0 0
    %1559 = vmatprep.subr.bf16.mxu0 0
    %1560 = vmatpush1.bf16.msra.mxu0 0
    %1561 = vmatprep.subr.bf16.mxu0 0
    %1562 = vmatpush1.bf16.msra.mxu0 0
    %1563 = vmatprep.mubr.bf16.mxu0 0
    %1564 = vmatmul.mubr.bf16.gmra.mrb[0].mxu0 %v1526
    %v1565 = vpop.f32.mrb[0].mxu0
    %v1566 = vadd.f32 0.0, %v1565
    %v1567 = vpop.f32.mrb[0].mxu0
    %v1568 = vpop.f32.mrb[0].mxu0
    %v1569 = vpop.f32.mrb[0].mxu0
    %1570 = vdwg.mxu0
    %1573 = vrot.lane.b32.xlu0 %v1518, 16
    %v1574 = vpop.permute.xlu0 %1573
    %1575 = vrot.lane.b32.xlu0 %v1566, 16
    %v1576 = vpop.permute.xlu0 %1575
    %v1579 = vsel %vm243, %v1422, %v1574
    %v1580 = vsel %vm243, %v1470, %v1576
    %v1581 = vpack.c.bf16 %v1580, %v1579
    %s1582 = scalar_lea.vmem %s6, 16
    %v1583 = vld [vmem:[%s1582] sm:$0xf]
    %v1584 = vld [vmem:[%s1582 + $0x4] sm:$0xf]
    %v1585 = vld [vmem:[%s1582 + $0x8] sm:$0xf]
    %v1586 = vld [vmem:[%s1582 + $0xc] sm:$0xf]
    %v1587 = vlaneseq
    %v1588 = vshrl.u32 %v1587, 7
    %v1589 = vsub.s32 0, %v1588
    %v1590 = vrot.slane %v1008, %v1589
    %v1595 = vunpack.c.l.b16 %v1583
    %v1596 = vunpack.c.l.b16 %v1584
    %v1597 = vunpack.c.l.b16 %v1585
    %v1598 = vunpack.c.l.b16 %v1586
    %v1599 = vpack.c.b16 %v1596, %v1595
    %v1600 = vpack.c.b16 %v1598, %v1597
    %v1604 = vsel %vm63, %v1581, 0
    %1606 = vmatprep.subr.bf16.mxu0 0
    %1607 = vmatpush1.bf16.msra.mxu0 %v1599
    %1608 = vmatprep.subr.bf16.mxu0 0
    %1609 = vmatpush1.bf16.msra.mxu0 %v1600
    %1610 = vmatprep.subr.bf16.mxu0 0
    %1611 = vmatpush1.bf16.msra.mxu0 0
    %1612 = vmatprep.subr.bf16.mxu0 0
    %1613 = vmatpush1.bf16.msra.mxu0 0
    %1614 = vmatprep.subr.bf16.mxu0 0
    %1615 = vmatpush1.bf16.msra.mxu0 0
    %1616 = vmatprep.subr.bf16.mxu0 0
    %1617 = vmatpush1.bf16.msra.mxu0 0
    %1618 = vmatprep.subr.bf16.mxu0 0
    %1619 = vmatpush1.bf16.msra.mxu0 0
    %1620 = vmatprep.subr.bf16.mxu0 0
    %1621 = vmatpush1.bf16.msra.mxu0 0
    %1622 = vmatprep.subr.bf16.mxu0 0
    %1623 = vmatpush1.bf16.msra.mxu0 0
    %1624 = vmatprep.subr.bf16.mxu0 0
    %1625 = vmatpush1.bf16.msra.mxu0 0
    %1626 = vmatprep.subr.bf16.mxu0 0
    %1627 = vmatpush1.bf16.msra.mxu0 0
    %1628 = vmatprep.subr.bf16.mxu0 0
    %1629 = vmatpush1.bf16.msra.mxu0 0
    %1630 = vmatprep.subr.bf16.mxu0 0
    %1631 = vmatpush1.bf16.msra.mxu0 0
    %1632 = vmatprep.subr.bf16.mxu0 0
    %1633 = vmatpush1.bf16.msra.mxu0 0
    %1634 = vmatprep.subr.bf16.mxu0 0
    %1635 = vmatpush1.bf16.msra.mxu0 0
    %1636 = vmatprep.subr.bf16.mxu0 0
    %1637 = vmatpush1.bf16.msra.mxu0 0
    %1638 = vmatprep.mubr.bf16.mxu0 0
    %1639 = vmatmul.mubr.bf16.gmra.mrb[0].mxu0 %v1604
    %v1640 = vpop.f32.mrb[0].mxu0
    %v1641 = vadd.f32 %v1590, %v1640
    %v1642 = vpop.f32.mrb[0].mxu0
    %v1643 = vpop.f32.mrb[0].mxu0
    %v1644 = vadd.f32 %v1590, %v1643
    %v1645 = vpop.f32.mrb[0].mxu0
    %1646 = vdwg.mxu0
    %v1647 = vadd.f32 %v999, %v1641
    %v1648 = vadd.f32 %v1000, %v1644
    %v1649 = vsel %vm63, %v1647, 0.0
    %1650 = vadd.xlane.f32.xlu0 %v1649
    %v1651 = vpop.xlane.xlu0 %1650
    %v1652 = vsel %vm63, %v1648, 0.0
    %1653 = vadd.xlane.f32.xlu0 %v1652
    %v1654 = vpop.xlane.xlu0 %1653
    %v1655 = vmul.f32 %v1651, %v130
    %v1656 = vmul.f32 %v1654, %v130
    %v1657 = vsub.f32 %v1647, %v1655
    %v1658 = vsub.f32 %v1648, %v1656
    %v1659 = vmul.f32 %v1657, %v1657
    %v1660 = vmul.f32 %v1658, %v1658
    %v1661 = vsel %vm63, %v1659, 0.0
    %1662 = vadd.xlane.f32.xlu0 %v1661
    %v1663 = vpop.xlane.xlu0 %1662
    %v1664 = vsel %vm63, %v1660, 0.0
    %1665 = vadd.xlane.f32.xlu0 %v1664
    %v1666 = vpop.xlane.xlu0 %1665
    %v1667 = vmul.f32 %v1663, %v130
    %v1668 = vmul.f32 %v1666, %v130
    %v1669 = vadd.f32 %v1667, 1e-05
    %v1670 = vadd.f32 %v1668, 1e-05
    %v1671 = vrsqrt.pop %v1669
    %v1672 = vrsqrt.pop %v1670
    %v1673 = vmul.f32 %v1657, %v1671
    %v1674 = vmul.f32 %v1658, %v1672
    %v1675 = vlaneseq
    %v1676 = vshrl.u32 %v1675, 7
    %v1677 = vsub.s32 0, %v1676
    %v1678 = vrot.slane %v1004, %v1677
    %v1679 = vmul.f32 %v1673, %v1678
    %v1680 = vmul.f32 %v1674, %v1678
    %v1681 = vlaneseq
    %v1682 = vshrl.u32 %v1681, 7
    %v1683 = vsub.s32 0, %v1682
    %v1684 = vrot.slane %v1005, %v1683
    %v1685 = vadd.f32 %v1679, %v1684
    %v1686 = vadd.f32 %v1680, %v1684
    %v1687 = vpack.c.bf16 %v1686, %v1685
    %s1688 = scalar_lea.vmem %s8, 16
    %v1689 = vld [vmem:[%s1688] sm:$0xf]
    %v1690 = vld [vmem:[%s1688 + $0x4] sm:$0xf]
    %v1691 = vld [vmem:[%s1688 + $0x8] sm:$0xf]
    %v1692 = vld [vmem:[%s1688 + $0xc] sm:$0xf]
    %v1693 = vlaneseq
    %v1694 = vshrl.u32 %v1693, 7
    %v1695 = vsub.s32 0, %v1694
    %v1696 = vrot.slane %v1009, %v1695
    %v1701 = vunpack.c.l.b16 %v1689
    %v1702 = vunpack.c.l.b16 %v1690
    %v1703 = vunpack.c.l.b16 %v1691
    %v1704 = vunpack.c.l.b16 %v1692
    %v1705 = vpack.c.b16 %v1702, %v1701
    %v1706 = vpack.c.b16 %v1704, %v1703
    %v1710 = vsel %vm63, %v1687, 0
    %1712 = vmatprep.subr.bf16.mxu0 0
    %1713 = vmatpush1.bf16.msra.mxu0 %v1705
    %1714 = vmatprep.subr.bf16.mxu0 0
    %1715 = vmatpush1.bf16.msra.mxu0 %v1706
    %1716 = vmatprep.subr.bf16.mxu0 0
    %1717 = vmatpush1.bf16.msra.mxu0 0
    %1718 = vmatprep.subr.bf16.mxu0 0
    %1719 = vmatpush1.bf16.msra.mxu0 0
    %1720 = vmatprep.subr.bf16.mxu0 0
    %1721 = vmatpush1.bf16.msra.mxu0 0
    %1722 = vmatprep.subr.bf16.mxu0 0
    %1723 = vmatpush1.bf16.msra.mxu0 0
    %1724 = vmatprep.subr.bf16.mxu0 0
    %1725 = vmatpush1.bf16.msra.mxu0 0
    %1726 = vmatprep.subr.bf16.mxu0 0
    %1727 = vmatpush1.bf16.msra.mxu0 0
    %1728 = vmatprep.subr.bf16.mxu0 0
    %1729 = vmatpush1.bf16.msra.mxu0 0
    %1730 = vmatprep.subr.bf16.mxu0 0
    %1731 = vmatpush1.bf16.msra.mxu0 0
    %1732 = vmatprep.subr.bf16.mxu0 0
    %1733 = vmatpush1.bf16.msra.mxu0 0
    %1734 = vmatprep.subr.bf16.mxu0 0
    %1735 = vmatpush1.bf16.msra.mxu0 0
    %1736 = vmatprep.subr.bf16.mxu0 0
    %1737 = vmatpush1.bf16.msra.mxu0 0
    %1738 = vmatprep.subr.bf16.mxu0 0
    %1739 = vmatpush1.bf16.msra.mxu0 0
    %1740 = vmatprep.subr.bf16.mxu0 0
    %1741 = vmatpush1.bf16.msra.mxu0 0
    %1742 = vmatprep.subr.bf16.mxu0 0
    %1743 = vmatpush1.bf16.msra.mxu0 0
    %1744 = vmatprep.mubr.bf16.mxu0 0
    %1745 = vmatmul.mubr.bf16.gmra.mrb[0].mxu0 %v1710
    %v1746 = vpop.f32.mrb[0].mxu0
    %v1747 = vadd.f32 %v1696, %v1746
    %v1748 = vpop.f32.mrb[0].mxu0
    %v1749 = vpop.f32.mrb[0].mxu0
    %v1750 = vadd.f32 %v1696, %v1749
    %v1751 = vpop.f32.mrb[0].mxu0
    %1752 = vdwg.mxu0
    %v1753 = vmul.f32 %v1747, 0.5
    %v1754 = vmul.f32 %v1750, 0.5
    %v1755 = vmul.f32 %v1747, %v1747
    %v1756 = vmul.f32 %v1750, %v1750
    %v1757 = vmul.f32 %v1755, %v1747
    %v1758 = vmul.f32 %v1756, %v1750
    %v1759 = vmul.f32 %v1757, 0.044715
    %v1760 = vmul.f32 %v1758, 0.044715
    %v1761 = vadd.f32 %v1747, %v1759
    %v1762 = vadd.f32 %v1750, %v1760
    %v1763 = vmul.f32 %v1761, 0.7978846
    %v1764 = vmul.f32 %v1762, 0.7978846
    %v1765 = vtanh.pop %v1763
    %v1766 = vtanh.pop %v1764
    %v1767 = vadd.f32 %v1765, 1.0
    %v1768 = vadd.f32 %v1766, 1.0
    %v1769 = vmul.f32 %v1753, %v1767
    %v1770 = vmul.f32 %v1754, %v1768
    %v1771 = vpack.c.bf16 %v1770, %v1769
    %s1772 = scalar_lea.vmem %s9, 64
    %v1773 = vld [vmem:[%s1772] sm:$0xf]
    %v1774 = vld [vmem:[%s1772 + $0x4] sm:$0xf]
    %v1775 = vld [vmem:[%s1772 + $0x8] sm:$0xf]
    %v1776 = vld [vmem:[%s1772 + $0xc] sm:$0xf]
    %v1777 = vld [vmem:[%s1772 + $0x10] sm:$0xf]
    %v1778 = vld [vmem:[%s1772 + $0x14] sm:$0xf]
    %v1779 = vld [vmem:[%s1772 + $0x18] sm:$0xf]
    %v1780 = vld [vmem:[%s1772 + $0x1c] sm:$0xf]
    %v1781 = vld [vmem:[%s1772 + $0x20] sm:$0xf]
    %v1782 = vld [vmem:[%s1772 + $0x24] sm:$0xf]
    %v1783 = vld [vmem:[%s1772 + $0x28] sm:$0xf]
    %v1784 = vld [vmem:[%s1772 + $0x2c] sm:$0xf]
    %v1785 = vld [vmem:[%s1772 + $0x30] sm:$0xf]
    %v1786 = vld [vmem:[%s1772 + $0x34] sm:$0xf]
    %v1787 = vld [vmem:[%s1772 + $0x38] sm:$0xf]
    %v1788 = vld [vmem:[%s1772 + $0x3c] sm:$0xf]
    %v1805 = vunpack.c.l.b16 %v1773
    %v1806 = vunpack.c.l.b16 %v1774
    %v1807 = vunpack.c.l.b16 %v1775
    %v1808 = vunpack.c.l.b16 %v1776
    %v1809 = vunpack.c.l.b16 %v1777
    %v1810 = vunpack.c.l.b16 %v1778
    %v1811 = vunpack.c.l.b16 %v1779
    %v1812 = vunpack.c.l.b16 %v1780
    %v1813 = vunpack.c.l.b16 %v1781
    %v1814 = vunpack.c.l.b16 %v1782
    %v1815 = vunpack.c.l.b16 %v1783
    %v1816 = vunpack.c.l.b16 %v1784
    %v1817 = vunpack.c.l.b16 %v1785
    %v1818 = vunpack.c.l.b16 %v1786
    %v1819 = vunpack.c.l.b16 %v1787
    %v1820 = vunpack.c.l.b16 %v1788
    %v1821 = vpack.c.b16 %v1806, %v1805
    %v1822 = vpack.c.b16 %v1808, %v1807
    %v1823 = vpack.c.b16 %v1810, %v1809
    %v1824 = vpack.c.b16 %v1812, %v1811
    %v1825 = vpack.c.b16 %v1814, %v1813
    %v1826 = vpack.c.b16 %v1816, %v1815
    %v1827 = vpack.c.b16 %v1818, %v1817
    %v1828 = vpack.c.b16 %v1820, %v1819
    %1837 = vmatprep.subr.bf16.mxu0 0
    %1838 = vmatpush1.bf16.msra.mxu0 %v1821
    %1839 = vmatprep.subr.bf16.mxu0 0
    %1840 = vmatpush1.bf16.msra.mxu0 %v1822
    %1841 = vmatprep.subr.bf16.mxu0 0
    %1842 = vmatpush1.bf16.msra.mxu0 %v1823
    %1843 = vmatprep.subr.bf16.mxu0 0
    %1844 = vmatpush1.bf16.msra.mxu0 %v1824
    %1845 = vmatprep.subr.bf16.mxu0 0
    %1846 = vmatpush1.bf16.msra.mxu0 %v1825
    %1847 = vmatprep.subr.bf16.mxu0 0
    %1848 = vmatpush1.bf16.msra.mxu0 %v1826
    %1849 = vmatprep.subr.bf16.mxu0 0
    %1850 = vmatpush1.bf16.msra.mxu0 %v1827
    %1851 = vmatprep.subr.bf16.mxu0 0
    %1852 = vmatpush1.bf16.msra.mxu0 %v1828
    %1853 = vmatprep.subr.bf16.mxu0 0
    %1854 = vmatpush1.bf16.msra.mxu0 0
    %1855 = vmatprep.subr.bf16.mxu0 0
    %1856 = vmatpush1.bf16.msra.mxu0 0
    %1857 = vmatprep.subr.bf16.mxu0 0
    %1858 = vmatpush1.bf16.msra.mxu0 0
    %1859 = vmatprep.subr.bf16.mxu0 0
    %1860 = vmatpush1.bf16.msra.mxu0 0
    %1861 = vmatprep.subr.bf16.mxu0 0
    %1862 = vmatpush1.bf16.msra.mxu0 0
    %1863 = vmatprep.subr.bf16.mxu0 0
    %1864 = vmatpush1.bf16.msra.mxu0 0
    %1865 = vmatprep.subr.bf16.mxu0 0
    %1866 = vmatpush1.bf16.msra.mxu0 0
    %1867 = vmatprep.subr.bf16.mxu0 0
    %1868 = vmatpush1.bf16.msra.mxu0 0
    %1869 = vmatprep.mubr.bf16.mxu0 0
    %1870 = vmatmul.mubr.bf16.gmra.mrb[0].mxu0 %v1771
    %v1871 = vpop.f32.mrb[0].mxu0
    %v1872 = vadd.f32 0.0, %v1871
    %v1873 = vpop.f32.mrb[0].mxu0
    %v1874 = vpop.f32.mrb[0].mxu0
    %v1875 = vadd.f32 0.0, %v1874
    %v1876 = vpop.f32.mrb[0].mxu0
    %1877 = vdwg.mxu0
    %v1878 = vadd.f32 %v1647, %v1872
    %v1879 = vadd.f32 %v1648, %v1875
    %v1880 = vlaneseq
    %v1881 = vshrl.u32 %v1880, 7
    %v1882 = vsub.s32 0, %v1881
    %v1883 = vrot.slane %v1010, %v1882
    %v1884 = vadd.f32 %v1878, %v1883
    %v1885 = vadd.f32 %v1879, %v1883
    %v1886 = vsel %vm63, %v1884, 0.0
    %1887 = vadd.xlane.f32.xlu0 %v1886
    %v1888 = vpop.xlane.xlu0 %1887
    %v1889 = vsel %vm63, %v1885, 0.0
    %1890 = vadd.xlane.f32.xlu0 %v1889
    %v1891 = vpop.xlane.xlu0 %1890
    %v1892 = vmul.f32 %v1888, %v130
    %v1893 = vmul.f32 %v1891, %v130
    %v1894 = vsub.f32 %v1884, %v1892
    %v1895 = vsub.f32 %v1885, %v1893
    %v1896 = vmul.f32 %v1894, %v1894
    %v1897 = vmul.f32 %v1895, %v1895
    %v1898 = vsel %vm63, %v1896, 0.0
    %1899 = vadd.xlane.f32.xlu0 %v1898
    %v1900 = vpop.xlane.xlu0 %1899
    %v1901 = vsel %vm63, %v1897, 0.0
    %1902 = vadd.xlane.f32.xlu0 %v1901
    %v1903 = vpop.xlane.xlu0 %1902
    %v1904 = vmul.f32 %v1900, %v130
    %v1905 = vmul.f32 %v1903, %v130
    %v1906 = vadd.f32 %v1904, 1e-05
    %v1907 = vadd.f32 %v1905, 1e-05
    %v1908 = vrsqrt.pop %v1906
    %v1909 = vrsqrt.pop %v1907
    %v1910 = vmul.f32 %v1894, %v1908
    %v1911 = vmul.f32 %v1895, %v1909
    %v1912 = vlaneseq
    %v1913 = vshrl.u32 %v1912, 7
    %v1914 = vsub.s32 0, %v1913
    %v1915 = vrot.slane %v38, %v1914
    %v1916 = vmul.f32 %v1910, %v1915
    %v1917 = vmul.f32 %v1911, %v1915
    %v1918 = vlaneseq
    %v1919 = vshrl.u32 %v1918, 7
    %v1920 = vsub.s32 0, %v1919
    %v1921 = vrot.slane %v39, %v1920
    %v1922 = vadd.f32 %v1916, %v1921
    %v1923 = vadd.f32 %v1917, %v1921
    %1924 = vst.msk [vmem:[#allocation2] sm:$0xff] %vm63, %v1922
    %1925 = vst.msk [vmem:[#allocation2 + $0x8] sm:$0xff] %vm63, %v1923
    // Predicated region
    $region42: #{_hidden_impl.1} parent=1 // pred_check
      _
    $region43: #{_hidden_impl.1} parent=1 // pred_check_branch
      %1927 = sbr.rel (0) target = $region45
    $region44: #{_hidden_impl.1} parent=1 // pred_region
      %s1929 = ssub.s32 256, 256
      %1930 = vsyncadd [#allocation3], %s1929
      %s1931 = sshll.u32 [#allocation2], 4
      %s1932 = int_to_ptr.vmem [resolvable:$true] %s1931
      %1937 = dma.vmem_to_hbm [thread:$0]  %s1932, 256, %s10, [#allocation3], 128, 128, 8
    $region45: #{_hidden_impl.1} parent=1 // pred_fallthru
      _
    // Predicated region
    $region46: #{_hidden_impl.1} parent=1 // pred_check
      _
    $region47: #{_hidden_impl.1} parent=1 // pred_check_branch
      %1939 = sbr.rel (0) target = $region49
    $region48: #{_hidden_impl.1} parent=1 // pred_region
      %1940 = dma.done [#allocation3], 256
    $region49: #{_hidden_impl.1} parent=1 // pred_fallthru
      _
    %1941 = vsyncpa [#allocation3], 1

</llo_original>
